<compile_context>
chip_gen: v6e
topology: v6e:2x2x1
jax: 0.10.0
libtpu: 0.0.40
codegen_flags: <defaults>
</compile_context>

<pallas_src>
import math

import jax
import jax.numpy as jnp
from jax.experimental import pallas as pl
from jax.experimental.pallas import tpu as pltpu


def _round_up(n, m):
    return ((n + m - 1) // m) * m


def example_net_kernel(sig_ref, dft_ref, w1_ref, b1_ref, w2_ref, b2_ref,
                       w3_ref, b3_ref, out_ref):
    """One grid step = all frames of one (batch, mic) signal row."""
    r, _, two_nfp = dft_ref.shape
    n_frame_pad = two_nfp // 2
    n_rows = out_ref.shape[1]                      # padded frame count per row

    # ---- feature extractor: framing + window-folded one-sided DFT -----------
    # Frame t, window sample n (= jj*hop + m) lives in hop block t+jj at offset
    # m, so  STFT[t] = sum_jj blocks[t+jj] @ D[jj]  with D the window-folded
    # split DFT. The overlapping frames are never materialized.
    blocks = sig_ref[0]                            # (n_hops_pad, hop) bf16
    d = jnp.dot(blocks[0:n_rows], dft_ref[0],
                preferred_element_type=jnp.float32)
    for jj in range(1, r):                         # r is static -> unrolled
        d = d + jnp.dot(blocks[jj:jj + n_rows], dft_ref[jj],
                        preferred_element_type=jnp.float32)
    re = d[:, :n_frame_pad]
    im = d[:, n_frame_pad:]
    feat = jnp.sqrt(re * re + im * im)             # magnitude, f32

    # ---- MLP over the frequency dimension (hidden zero-padded to 128) -------
    h = jnp.maximum(
        jnp.dot(feat.astype(jnp.bfloat16), w1_ref[...],
                preferred_element_type=jnp.float32) + b1_ref[...], 0.0)
    h = jnp.maximum(
        jnp.dot(h.astype(jnp.bfloat16), w2_ref[...],
                preferred_element_type=jnp.float32) + b2_ref[...], 0.0)
    out = jnp.dot(h.astype(jnp.bfloat16), w3_ref[...],
                  preferred_element_type=jnp.float32) + b3_ref[...]
    # output_activation=None, batch_norm=False, dropout (eval) == identity.
    out_ref[0] = out                               # (n_rows, n_out_pad) f32


def example_net_forward(x, params, *, n_fft, hop):
    sig = x['signal']
    B, M, L = sig.shape
    assert n_fft % hop == 0, "in-kernel framing assumes hop | n_fft"
    r = n_fft // hop
    n_frames = 1 + (L - n_fft) // hop              # center=False framing
    n_hops = n_frames + r - 1                      # hop blocks actually used

    dft = params['dft']                            # (r, hop, 2*n_frame_pad) bf16
    n_frame_pad = dft.shape[2] // 2
    h_pad = params['w1'].shape[1]
    n_out_pad = params['w3'].shape[1]
    n_out = params['n_out']

    BM = B * M
    nf_pad = _round_up(n_frames, 8)                # frame rows per grid step
    nh_pad = nf_pad + r - 1

    # Hop-block view of the raw signal: truncate to used samples, cast to bf16
    # BEFORE any materialization, reshape (free), small zero pad for frame-row
    # alignment. No r-times duplicated frames array is ever written to HBM.
    # TODO(synk): for very long signals add a frame-tile grid axis instead of
    # processing a whole (batch, mic) row per step.
    blocks = sig[..., :n_hops * hop].astype(jnp.bfloat16).reshape(BM, n_hops, hop)
    if nh_pad != n_hops:
        blocks = jnp.pad(blocks, ((0, 0), (0, nh_pad - n_hops), (0, 0)))

    weights = (dft, params['w1'], params['b1'], params['w2'], params['b2'],
               params['w3'], params['b3'])
    w_bytes = sum(int(w.size) * w.dtype.itemsize for w in weights)

    # XLA-scheduler hint.
    flops = 2 * BM * nf_pad * (n_fft * 2 * n_frame_pad + n_frame_pad * h_pad
                               + h_pad * h_pad + h_pad * n_out_pad)
    bytes_accessed = int(blocks.size) * 2 + BM * nf_pad * n_out_pad * 4 + w_bytes
    cost = pl.CostEstimate(flops=flops,
                           transcendentals=BM * nf_pad * n_frame_pad,
                           bytes_accessed=bytes_accessed)

    # Per-step VMEM budget: streamed signal/output tiles (x2 buffers), resident
    # weights (worst case x2), DFT accumulator + MLP temps. Lifts v5e's 16 MiB
    # scoped default when needed, capped below v7x's 64 MiB physical VMEM.
    per_step = (2 * nh_pad * hop * 2
                + 2 * nf_pad * n_out_pad * 4
                + 2 * w_bytes
                + 2 * nf_pad * 2 * n_frame_pad * 4
                + 4 * nf_pad * h_pad * 4)
    vmem_limit = int(min(max(2 * per_step + (4 << 20), 32 << 20), 48 << 20))

    def run(single_buffer_weights):
        def wspec(arr):
            imap = lambda i, nd=arr.ndim: (0,) * nd
            if single_buffer_weights:
                return pl.BlockSpec(arr.shape, imap, pipeline_mode=pl.Buffered(1))
            return pl.BlockSpec(arr.shape, imap)

        in_specs = [pl.BlockSpec((1, nh_pad, hop), lambda i: (i, 0, 0))]
        in_specs += [wspec(w) for w in weights]
        out_spec = pl.BlockSpec((1, nf_pad, n_out_pad), lambda i: (i, 0, 0))

        out = pl.pallas_call(
            example_net_kernel,
            out_shape=jax.ShapeDtypeStruct((BM, nf_pad, n_out_pad), jnp.float32),
            grid=(BM,),
            in_specs=in_specs,
            out_specs=out_spec,
            compiler_params=pltpu.CompilerParams(
                dimension_semantics=("parallel",),   # (b, mic) rows shard across TCs
                vmem_limit_bytes=vmem_limit),
            cost_estimate=cost,
        )(blocks, *weights)
        return jax.block_until_ready(out)

    try:
        out = run(single_buffer_weights=True)
    except Exception:
        # TODO(synk): pipeline_mode=pl.Buffered(1) (single-buffered resident
        # weights) needs a recent jax; fall back to default double buffering.
        out = run(single_buffer_weights=False)

    out = out[:, :n_frames, :n_out].reshape(B, M, n_frames, n_out)
    return {'example_output': out}


def make_params(key, *, n_fft, hop, n_frame, n_hidden, n_out):
    """Deterministic synthetic parameters (PyTorch nn.Linear-style uniform init)."""
    assert n_fft % hop == 0
    r = n_fft // hop
    n_frame_pad = _round_up(n_frame, 128)
    h_pad = _round_up(n_hidden, 128)       # >=128 MXU lanes for all MLP matmuls
    n_out_pad = _round_up(n_out, 8)
    ks = jax.random.split(key, 6)

    def linear(kw, kb, fan_in, fan_out):
        bound = 1.0 / math.sqrt(fan_in)
        w = jax.random.uniform(kw, (fan_in, fan_out), jnp.float32, -bound, bound)
        b = jax.random.uniform(kb, (1, fan_out), jnp.float32, -bound, bound)
        return w, b

    w1, b1 = linear(ks[0], ks[1], n_frame, n_hidden)
    w2, b2 = linear(ks[2], ks[3], n_hidden, n_hidden)
    w3, b3 = linear(ks[4], ks[5], n_hidden, n_out)

    # Fixed (non-learned) STFT pieces: periodic Hann window folded into the
    # one-sided real-DFT matrices (diag(win) @ [cos | -sin]), zero-padded to a
    # 128-lane frequency axis and reshaped into per-hop-block slices so the
    # kernel fuses the overlapping framing into r shifted matmuls.
    n = jnp.arange(n_fft, dtype=jnp.float32)
    win = 0.5 - 0.5 * jnp.cos(2.0 * jnp.pi * n / n_fft)          # periodic Hann
    k = jnp.arange(n_frame, dtype=jnp.float32)
    ang = 2.0 * jnp.pi * n[:, None] * k[None, :] / n_fft         # (n_fft, n_frame)
    cos_w = win[:, None] * jnp.cos(ang)
    sin_w = win[:, None] * (-jnp.sin(ang))
    padf = lambda m: jnp.pad(m, ((0, 0), (0, n_frame_pad - n_frame)))
    dft = jnp.concatenate([padf(cos_w), padf(sin_w)], axis=1)    # (n_fft, 2*nfp)
    dft = dft.reshape(r, hop, 2 * n_frame_pad)
    # TODO(synk): keep dft (and the signal) in f32 if bit-closer parity with an
    # f32 torch.stft feature extractor is required (costs MXU rate).

    # Zero-pad: w1 rows to the padded frequency axis, the hidden dim to 128 on
    # w1/b1/w2/b2/w3 (padded hidden units stay exactly 0 through the ReLUs),
    # and w3/b3 output cols to a multiple of 8 (sliced off by the wrapper).
    pad2 = lambda m, rr, cc: jnp.pad(m, ((0, rr - m.shape[0]), (0, cc - m.shape[1])))
    return dict(
        dft=dft.astype(jnp.bfloat16),
        w1=pad2(w1, n_frame_pad, h_pad).astype(jnp.bfloat16),
        b1=pad2(b1, 1, h_pad),
        w2=pad2(w2, h_pad, h_pad).astype(jnp.bfloat16),
        b2=pad2(b2, 1, h_pad),
        w3=pad2(w3, h_pad, n_out_pad).astype(jnp.bfloat16),
        b3=pad2(b3, 1, n_out_pad),
        n_out=n_out,
    )


if __name__ == "__main__":
    # Small config consistent with the module's forward:
    #   batch=2, n_mics=4, n_fft=32, hop=16 -> n_frames=8, n_frame=17
    #   MLP: n_hidden_features=32, n_layers=3, n_output_features=8, relu,
    #   no batch_norm, dropout inactive (eval).
    B, M = 2, 4
    N_FFT, HOP = 32, 16
    N_FRAMES = 8
    L = N_FFT + (N_FRAMES - 1) * HOP               # 144 samples
    N_FRAME = N_FFT // 2 + 1                       # 17 one-sided bins
    N_HIDDEN, N_OUT = 32, 8

    key = jax.random.PRNGKey(0)
    k_sig, k_meta, k_par = jax.random.split(key, 3)

    x = {
        'signal': jax.random.normal(k_sig, (B, M, L), jnp.float32),
        'metadata': jax.random.normal(k_meta, (B, M, 3), jnp.float32),  # passthrough only
    }
    params = make_params(k_par, n_fft=N_FFT, hop=HOP, n_frame=N_FRAME,
                         n_hidden=N_HIDDEN, n_out=N_OUT)

    out = example_net_forward(x, params, n_fft=N_FFT, hop=HOP)
    jax.block_until_ready(out['example_output'])
    assert out['example_output'].shape == (B, M, N_FRAMES, N_OUT)
    # TODO(synk): the original feature_extractor class is config-dispatched
    # (get_class(config['features']['class'])); a fixed magnitude STFT
    # (periodic Hann, one-sided, center=False) is implemented here.
    print("KERNEL_OK")
</pallas_src>

<mosaic_0001>
module attributes {stable_mosaic.version = 11 : i64} {
  func.func @example_net_kernel(%arg0: i32, %arg1: memref<1x9x16xbf16, #tpu.memory_space<vmem>>, %arg2: memref<2x16x256xbf16, #tpu.memory_space<vmem>>, %arg3: memref<128x128xbf16, #tpu.memory_space<vmem>>, %arg4: memref<1x128xf32, #tpu.memory_space<vmem>>, %arg5: memref<128x128xbf16, #tpu.memory_space<vmem>>, %arg6: memref<1x128xf32, #tpu.memory_space<vmem>>, %arg7: memref<128x8xbf16, #tpu.memory_space<vmem>>, %arg8: memref<1x8xf32, #tpu.memory_space<vmem>>, %arg9: memref<1x8x8xf32, #tpu.memory_space<vmem>>) attributes {dimension_semantics = [#tpu.dimension_semantics<parallel>], iteration_bounds = array<i64: 8>, scalar_prefetch = 0 : i64, scratch_operands = 0 : i64, tpu.core_type = #tpu.core_type<tc>, window_params = [{transform_indices = @transform_0, window_bounds = array<i64: 1, 9, 16>}, {pipeline_mode = #tpu.pipeline_mode<synchronous>, transform_indices = @transform_1, window_bounds = array<i64: 2, 16, 256>}, {pipeline_mode = #tpu.pipeline_mode<synchronous>, transform_indices = @transform_2, window_bounds = array<i64: 128, 128>}, {pipeline_mode = #tpu.pipeline_mode<synchronous>, transform_indices = @transform_3, window_bounds = array<i64: 1, 128>}, {pipeline_mode = #tpu.pipeline_mode<synchronous>, transform_indices = @transform_4, window_bounds = array<i64: 128, 128>}, {pipeline_mode = #tpu.pipeline_mode<synchronous>, transform_indices = @transform_5, window_bounds = array<i64: 1, 128>}, {pipeline_mode = #tpu.pipeline_mode<synchronous>, transform_indices = @transform_6, window_bounds = array<i64: 128, 8>}, {pipeline_mode = #tpu.pipeline_mode<synchronous>, transform_indices = @transform_7, window_bounds = array<i64: 1, 8>}, {transform_indices = @transform_8, window_bounds = array<i64: 1, 8, 8>}]} {
    %c0 = arith.constant 0 : index
    %c0_0 = arith.constant 0 : index
    %c0_1 = arith.constant 0 : index
    %0 = vector.load %arg1[%c0, %c0_0, %c0_1] : memref<1x9x16xbf16, #tpu.memory_space<vmem>>, vector<1x9x16xbf16>
    %1 = vector.shape_cast %0 : vector<1x9x16xbf16> to vector<9x16xbf16>
    %2 = vector.extract_strided_slice %1 {offsets = [0, 0], sizes = [8, 16], strides = [1, 1]} : vector<9x16xbf16> to vector<8x16xbf16>
    %c0_2 = arith.constant 0 : index
    %c0_3 = arith.constant 0 : index
    %c0_4 = arith.constant 0 : index
    %3 = vector.load %arg2[%c0_2, %c0_3, %c0_4] : memref<2x16x256xbf16, #tpu.memory_space<vmem>>, vector<1x16x256xbf16>
    %4 = vector.shape_cast %3 : vector<1x16x256xbf16> to vector<16x256xbf16>
    %cst = arith.constant dense<0.000000e+00> : vector<8x256xf32>
    %5 = tpu.matmul %2, %4, %cst {dimension_numbers = #tpu.dot_dimension_numbers<[1], [0], [0], [1], [0, 0, 1, 1], [], []>} : vector<8x16xbf16>, vector<16x256xbf16>, vector<8x256xf32> -> vector<8x256xf32>
    %6 = vector.extract_strided_slice %1 {offsets = [1, 0], sizes = [8, 16], strides = [1, 1]} : vector<9x16xbf16> to vector<8x16xbf16>
    %c1 = arith.constant 1 : index
    %c0_5 = arith.constant 0 : index
    %c0_6 = arith.constant 0 : index
    %7 = vector.load %arg2[%c1, %c0_5, %c0_6] : memref<2x16x256xbf16, #tpu.memory_space<vmem>>, vector<1x16x256xbf16>
    %8 = vector.shape_cast %7 : vector<1x16x256xbf16> to vector<16x256xbf16>
    %cst_7 = arith.constant dense<0.000000e+00> : vector<8x256xf32>
    %9 = tpu.matmul %6, %8, %cst_7 {dimension_numbers = #tpu.dot_dimension_numbers<[1], [0], [0], [1], [0, 0, 1, 1], [], []>} : vector<8x16xbf16>, vector<16x256xbf16>, vector<8x256xf32> -> vector<8x256xf32>
    %10 = arith.addf %5, %9 : vector<8x256xf32>
    %11 = vector.extract_strided_slice %10 {offsets = [0, 0], sizes = [8, 128], strides = [1, 1]} : vector<8x256xf32> to vector<8x128xf32>
    %12 = vector.extract_strided_slice %10 {offsets = [0, 128], sizes = [8, 128], strides = [1, 1]} : vector<8x256xf32> to vector<8x128xf32>
    %13 = arith.mulf %11, %11 : vector<8x128xf32>
    %14 = arith.mulf %12, %12 : vector<8x128xf32>
    %15 = arith.addf %13, %14 : vector<8x128xf32>
    %16 = math.sqrt %15 : vector<8x128xf32>
    %17 = arith.truncf %16 : vector<8x128xf32> to vector<8x128xbf16>
    %c0_8 = arith.constant 0 : index
    %c0_9 = arith.constant 0 : index
    %18 = vector.load %arg3[%c0_8, %c0_9] : memref<128x128xbf16, #tpu.memory_space<vmem>>, vector<128x128xbf16>
    %cst_10 = arith.constant dense<0.000000e+00> : vector<8x128xf32>
    %19 = tpu.matmul %17, %18, %cst_10 {dimension_numbers = #tpu.dot_dimension_numbers<[1], [0], [0], [1], [0, 0, 1, 1], [], []>} : vector<8x128xbf16>, vector<128x128xbf16>, vector<8x128xf32> -> vector<8x128xf32>
    %c0_11 = arith.constant 0 : index
    %c0_12 = arith.constant 0 : index
    %20 = vector.load %arg4[%c0_11, %c0_12] : memref<1x128xf32, #tpu.memory_space<vmem>>, vector<1x128xf32>
    %21 = vector.broadcast %20 : vector<1x128xf32> to vector<8x128xf32>
    %22 = arith.addf %19, %21 : vector<8x128xf32>
    %cst_13 = arith.constant 0.000000e+00 : f32
    %23 = vector.broadcast %cst_13 : f32 to vector<8x128xf32>
    %24 = arith.maximumf %22, %23 : vector<8x128xf32>
    %25 = arith.truncf %24 : vector<8x128xf32> to vector<8x128xbf16>
    %c0_14 = arith.constant 0 : index
    %c0_15 = arith.constant 0 : index
    %26 = vector.load %arg5[%c0_14, %c0_15] : memref<128x128xbf16, #tpu.memory_space<vmem>>, vector<128x128xbf16>
    %cst_16 = arith.constant dense<0.000000e+00> : vector<8x128xf32>
    %27 = tpu.matmul %25, %26, %cst_16 {dimension_numbers = #tpu.dot_dimension_numbers<[1], [0], [0], [1], [0, 0, 1, 1], [], []>} : vector<8x128xbf16>, vector<128x128xbf16>, vector<8x128xf32> -> vector<8x128xf32>
    %c0_17 = arith.constant 0 : index
    %c0_18 = arith.constant 0 : index
    %28 = vector.load %arg6[%c0_17, %c0_18] : memref<1x128xf32, #tpu.memory_space<vmem>>, vector<1x128xf32>
    %29 = vector.broadcast %28 : vector<1x128xf32> to vector<8x128xf32>
    %30 = arith.addf %27, %29 : vector<8x128xf32>
    %cst_19 = arith.constant 0.000000e+00 : f32
    %31 = vector.broadcast %cst_19 : f32 to vector<8x128xf32>
    %32 = arith.maximumf %30, %31 : vector<8x128xf32>
    %33 = arith.truncf %32 : vector<8x128xf32> to vector<8x128xbf16>
    %c0_20 = arith.constant 0 : index
    %c0_21 = arith.constant 0 : index
    %34 = vector.load %arg7[%c0_20, %c0_21] : memref<128x8xbf16, #tpu.memory_space<vmem>>, vector<128x8xbf16>
    %cst_22 = arith.constant dense<0.000000e+00> : vector<8x8xf32>
    %35 = tpu.matmul %33, %34, %cst_22 {dimension_numbers = #tpu.dot_dimension_numbers<[1], [0], [0], [1], [0, 0, 1, 1], [], []>} : vector<8x128xbf16>, vector<128x8xbf16>, vector<8x8xf32> -> vector<8x8xf32>
    %c0_23 = arith.constant 0 : index
    %c0_24 = arith.constant 0 : index
    %36 = vector.load %arg8[%c0_23, %c0_24] : memref<1x8xf32, #tpu.memory_space<vmem>>, vector<1x8xf32>
    %37 = vector.broadcast %36 : vector<1x8xf32> to vector<8x8xf32>
    %38 = arith.addf %35, %37 : vector<8x8xf32>
    %c0_25 = arith.constant 0 : index
    %c0_26 = arith.constant 0 : index
    %c0_27 = arith.constant 0 : index
    %39 = vector.load %arg9[%c0_25, %c0_26, %c0_27] : memref<1x8x8xf32, #tpu.memory_space<vmem>>, vector<1x8x8xf32>
    %40 = vector.shape_cast %39 : vector<1x8x8xf32> to vector<8x8xf32>
    %41 = vector.shape_cast %38 : vector<8x8xf32> to vector<1x8x8xf32>
    tpu.vector_store %arg9[%c0_25, %c0_26, %c0_27], %41 {strides = array<i32>} : memref<1x8x8xf32, #tpu.memory_space<vmem>>, vector<1x8x8xf32>,
    return
  }
  func.func @transform_0(%arg0: i32) -> (i32, i32, i32) {
    %c0_i32 = arith.constant 0 : i32
    %c0_i32_0 = arith.constant 0 : i32
    %c0_i32_1 = arith.constant 0 : i32
    return %arg0, %c0_i32, %c0_i32_0 : i32, i32, i32
  }
  func.func @transform_1(%arg0: i32) -> (i32, i32, i32) {
    %c0_i32 = arith.constant 0 : i32
    %c0_i32_0 = arith.constant 0 : i32
    %c0_i32_1 = arith.constant 0 : i32
    %c0_i32_2 = arith.constant 0 : i32
    return %c0_i32, %c0_i32_0, %c0_i32_1 : i32, i32, i32
  }
  func.func @transform_2(%arg0: i32) -> (i32, i32) {
    %c0_i32 = arith.constant 0 : i32
    %c0_i32_0 = arith.constant 0 : i32
    %c0_i32_1 = arith.constant 0 : i32
    return %c0_i32, %c0_i32_0 : i32, i32
  }
  func.func @transform_3(%arg0: i32) -> (i32, i32) {
    %c0_i32 = arith.constant 0 : i32
    %c0_i32_0 = arith.constant 0 : i32
    %c0_i32_1 = arith.constant 0 : i32
    return %c0_i32, %c0_i32_0 : i32, i32
  }
  func.func @transform_4(%arg0: i32) -> (i32, i32) {
    %c0_i32 = arith.constant 0 : i32
    %c0_i32_0 = arith.constant 0 : i32
    %c0_i32_1 = arith.constant 0 : i32
    return %c0_i32, %c0_i32_0 : i32, i32
  }
  func.func @transform_5(%arg0: i32) -> (i32, i32) {
    %c0_i32 = arith.constant 0 : i32
    %c0_i32_0 = arith.constant 0 : i32
    %c0_i32_1 = arith.constant 0 : i32
    return %c0_i32, %c0_i32_0 : i32, i32
  }
  func.func @transform_6(%arg0: i32) -> (i32, i32) {
    %c0_i32 = arith.constant 0 : i32
    %c0_i32_0 = arith.constant 0 : i32
    %c0_i32_1 = arith.constant 0 : i32
    return %c0_i32, %c0_i32_0 : i32, i32
  }
  func.func @transform_7(%arg0: i32) -> (i32, i32) {
    %c0_i32 = arith.constant 0 : i32
    %c0_i32_0 = arith.constant 0 : i32
    %c0_i32_1 = arith.constant 0 : i32
    return %c0_i32, %c0_i32_0 : i32, i32
  }
  func.func @transform_8(%arg0: i32) -> (i32, i32, i32) {
    %c0_i32 = arith.constant 0 : i32
    %c0_i32_0 = arith.constant 0 : i32
    %c0_i32_1 = arith.constant 0 : i32
    return %arg0, %c0_i32, %c0_i32_0 : i32, i32, i32
  }
}

module attributes {stable_mosaic.version = 11 : i64} {
  func.func @example_net_kernel(%arg0: i32, %arg1: memref<1x9x16xbf16, #tpu.memory_space<vmem>>, %arg2: memref<2x16x256xbf16, #tpu.memory_space<vmem>>, %arg3: memref<128x128xbf16, #tpu.memory_space<vmem>>, %arg4: memref<1x128xf32, #tpu.memory_space<vmem>>, %arg5: memref<128x128xbf16, #tpu.memory_space<vmem>>, %arg6: memref<1x128xf32, #tpu.memory_space<vmem>>, %arg7: memref<128x8xbf16, #tpu.memory_space<vmem>>, %arg8: memref<1x8xf32, #tpu.memory_space<vmem>>, %arg9: memref<1x8x8xf32, #tpu.memory_space<vmem>>) attributes {dimension_semantics = [#tpu.dimension_semantics<parallel>], iteration_bounds = array<i64: 8>, scalar_prefetch = 0 : i64, scratch_operands = 0 : i64, tpu.core_type = #tpu.core_type<tc>, window_params = [{transform_indices = @transform_0, window_bounds = array<i64: 1, 9, 16>}, {pipeline_mode = #tpu.pipeline_mode<synchronous>, transform_indices = @transform_1, window_bounds = array<i64: 2, 16, 256>}, {pipeline_mode = #tpu.pipeline_mode<synchronous>, transform_indices = @transform_2, window_bounds = array<i64: 128, 128>}, {pipeline_mode = #tpu.pipeline_mode<synchronous>, transform_indices = @transform_3, window_bounds = array<i64: 1, 128>}, {pipeline_mode = #tpu.pipeline_mode<synchronous>, transform_indices = @transform_4, window_bounds = array<i64: 128, 128>}, {pipeline_mode = #tpu.pipeline_mode<synchronous>, transform_indices = @transform_5, window_bounds = array<i64: 1, 128>}, {pipeline_mode = #tpu.pipeline_mode<synchronous>, transform_indices = @transform_6, window_bounds = array<i64: 128, 8>}, {pipeline_mode = #tpu.pipeline_mode<synchronous>, transform_indices = @transform_7, window_bounds = array<i64: 1, 8>}, {transform_indices = @transform_8, window_bounds = array<i64: 1, 8, 8>}]} {
    %c0 = arith.constant 0 : index
    %c0_0 = arith.constant 0 : index
    %c0_1 = arith.constant 0 : index
    %0 = vector.load %arg1[%c0, %c0_0, %c0_1] : memref<1x9x16xbf16, #tpu.memory_space<vmem>>, vector<1x9x16xbf16>
    %1 = vector.shape_cast %0 : vector<1x9x16xbf16> to vector<9x16xbf16>
    %2 = vector.extract_strided_slice %1 {offsets = [0, 0], sizes = [8, 16], strides = [1, 1]} : vector<9x16xbf16> to vector<8x16xbf16>
    %c0_2 = arith.constant 0 : index
    %c0_3 = arith.constant 0 : index
    %c0_4 = arith.constant 0 : index
    %3 = vector.load %arg2[%c0_2, %c0_3, %c0_4] : memref<2x16x256xbf16, #tpu.memory_space<vmem>>, vector<1x16x256xbf16>
    %4 = vector.shape_cast %3 : vector<1x16x256xbf16> to vector<16x256xbf16>
    %cst = arith.constant dense<0.000000e+00> : vector<8x256xf32>
    %5 = tpu.matmul %2, %4, %cst {dimension_numbers = #tpu.dot_dimension_numbers<[1], [0], [0], [1], [0, 0, 1, 1], [], []>} : vector<8x16xbf16>, vector<16x256xbf16>, vector<8x256xf32> -> vector<8x256xf32>
    %6 = vector.extract_strided_slice %1 {offsets = [1, 0], sizes = [8, 16], strides = [1, 1]} : vector<9x16xbf16> to vector<8x16xbf16>
    %c1 = arith.constant 1 : index
    %c0_5 = arith.constant 0 : index
    %c0_6 = arith.constant 0 : index
    %7 = vector.load %arg2[%c1, %c0_5, %c0_6] : memref<2x16x256xbf16, #tpu.memory_space<vmem>>, vector<1x16x256xbf16>
    %8 = vector.shape_cast %7 : vector<1x16x256xbf16> to vector<16x256xbf16>
    %cst_7 = arith.constant dense<0.000000e+00> : vector<8x256xf32>
    %9 = tpu.matmul %6, %8, %cst_7 {dimension_numbers = #tpu.dot_dimension_numbers<[1], [0], [0], [1], [0, 0, 1, 1], [], []>} : vector<8x16xbf16>, vector<16x256xbf16>, vector<8x256xf32> -> vector<8x256xf32>
    %10 = arith.addf %5, %9 : vector<8x256xf32>
    %11 = vector.extract_strided_slice %10 {offsets = [0, 0], sizes = [8, 128], strides = [1, 1]} : vector<8x256xf32> to vector<8x128xf32>
    %12 = vector.extract_strided_slice %10 {offsets = [0, 128], sizes = [8, 128], strides = [1, 1]} : vector<8x256xf32> to vector<8x128xf32>
    %13 = arith.mulf %11, %11 : vector<8x128xf32>
    %14 = arith.mulf %12, %12 : vector<8x128xf32>
    %15 = arith.addf %13, %14 : vector<8x128xf32>
    %16 = math.sqrt %15 : vector<8x128xf32>
    %17 = arith.truncf %16 : vector<8x128xf32> to vector<8x128xbf16>
    %c0_8 = arith.constant 0 : index
    %c0_9 = arith.constant 0 : index
    %18 = vector.load %arg3[%c0_8, %c0_9] : memref<128x128xbf16, #tpu.memory_space<vmem>>, vector<128x128xbf16>
    %cst_10 = arith.constant dense<0.000000e+00> : vector<8x128xf32>
    %19 = tpu.matmul %17, %18, %cst_10 {dimension_numbers = #tpu.dot_dimension_numbers<[1], [0], [0], [1], [0, 0, 1, 1], [], []>} : vector<8x128xbf16>, vector<128x128xbf16>, vector<8x128xf32> -> vector<8x128xf32>
    %c0_11 = arith.constant 0 : index
    %c0_12 = arith.constant 0 : index
    %20 = vector.load %arg4[%c0_11, %c0_12] : memref<1x128xf32, #tpu.memory_space<vmem>>, vector<1x128xf32>
    %21 = vector.broadcast %20 : vector<1x128xf32> to vector<8x128xf32>
    %22 = arith.addf %19, %21 : vector<8x128xf32>
    %cst_13 = arith.constant 0.000000e+00 : f32
    %23 = vector.broadcast %cst_13 : f32 to vector<8x128xf32>
    %24 = arith.maximumf %22, %23 : vector<8x128xf32>
    %25 = arith.truncf %24 : vector<8x128xf32> to vector<8x128xbf16>
    %c0_14 = arith.constant 0 : index
    %c0_15 = arith.constant 0 : index
    %26 = vector.load %arg5[%c0_14, %c0_15] : memref<128x128xbf16, #tpu.memory_space<vmem>>, vector<128x128xbf16>
    %cst_16 = arith.constant dense<0.000000e+00> : vector<8x128xf32>
    %27 = tpu.matmul %25, %26, %cst_16 {dimension_numbers = #tpu.dot_dimension_numbers<[1], [0], [0], [1], [0, 0, 1, 1], [], []>} : vector<8x128xbf16>, vector<128x128xbf16>, vector<8x128xf32> -> vector<8x128xf32>
    %c0_17 = arith.constant 0 : index
    %c0_18 = arith.constant 0 : index
    %28 = vector.load %arg6[%c0_17, %c0_18] : memref<1x128xf32, #tpu.memory_space<vmem>>, vector<1x128xf32>
    %29 = vector.broadcast %28 : vector<1x128xf32> to vector<8x128xf32>
    %30 = arith.addf %27, %29 : vector<8x128xf32>
    %cst_19 = arith.constant 0.000000e+00 : f32
    %31 = vector.broadcast %cst_19 : f32 to vector<8x128xf32>
    %32 = arith.maximumf %30, %31 : vector<8x128xf32>
    %33 = arith.truncf %32 : vector<8x128xf32> to vector<8x128xbf16>
    %c0_20 = arith.constant 0 : index
    %c0_21 = arith.constant 0 : index
    %34 = vector.load %arg7[%c0_20, %c0_21] : memref<128x8xbf16, #tpu.memory_space<vmem>>, vector<128x8xbf16>
    %cst_22 = arith.constant dense<0.000000e+00> : vector<8x8xf32>
    %35 = tpu.matmul %33, %34, %cst_22 {dimension_numbers = #tpu.dot_dimension_numbers<[1], [0], [0], [1], [0, 0, 1, 1], [], []>} : vector<8x128xbf16>, vector<128x8xbf16>, vector<8x8xf32> -> vector<8x8xf32>
    %c0_23 = arith.constant 0 : index
    %c0_24 = arith.constant 0 : index
    %36 = vector.load %arg8[%c0_23, %c0_24] : memref<1x8xf32, #tpu.memory_space<vmem>>, vector<1x8xf32>
    %37 = vector.broadcast %36 : vector<1x8xf32> to vector<8x8xf32>
    %38 = arith.addf %35, %37 : vector<8x8xf32>
    %c0_25 = arith.constant 0 : index
    %c0_26 = arith.constant 0 : index
    %c0_27 = arith.constant 0 : index
    %39 = vector.load %arg9[%c0_25, %c0_26, %c0_27] : memref<1x8x8xf32, #tpu.memory_space<vmem>>, vector<1x8x8xf32>
    %40 = vector.shape_cast %39 : vector<1x8x8xf32> to vector<8x8xf32>
    %41 = vector.shape_cast %38 : vector<8x8xf32> to vector<1x8x8xf32>
    tpu.vector_store %arg9[%c0_25, %c0_26, %c0_27], %41 {strides = array<i32>} : memref<1x8x8xf32, #tpu.memory_space<vmem>>, vector<1x8x8xf32>,
    return
  }
  func.func @transform_0(%arg0: i32) -> (i32, i32, i32) {
    %c0_i32 = arith.constant 0 : i32
    %c0_i32_0 = arith.constant 0 : i32
    %c0_i32_1 = arith.constant 0 : i32
    return %arg0, %c0_i32, %c0_i32_0 : i32, i32, i32
  }
  func.func @transform_1(%arg0: i32) -> (i32, i32, i32) {
    %c0_i32 = arith.constant 0 : i32
    %c0_i32_0 = arith.constant 0 : i32
    %c0_i32_1 = arith.constant 0 : i32
    %c0_i32_2 = arith.constant 0 : i32
    return %c0_i32, %c0_i32_0, %c0_i32_1 : i32, i32, i32
  }
  func.func @transform_2(%arg0: i32) -> (i32, i32) {
    %c0_i32 = arith.constant 0 : i32
    %c0_i32_0 = arith.constant 0 : i32
    %c0_i32_1 = arith.constant 0 : i32
    return %c0_i32, %c0_i32_0 : i32, i32
  }
  func.func @transform_3(%arg0: i32) -> (i32, i32) {
    %c0_i32 = arith.constant 0 : i32
    %c0_i32_0 = arith.constant 0 : i32
    %c0_i32_1 = arith.constant 0 : i32
    return %c0_i32, %c0_i32_0 : i32, i32
  }
  func.func @transform_4(%arg0: i32) -> (i32, i32) {
    %c0_i32 = arith.constant 0 : i32
    %c0_i32_0 = arith.constant 0 : i32
    %c0_i32_1 = arith.constant 0 : i32
    return %c0_i32, %c0_i32_0 : i32, i32
  }
  func.func @transform_5(%arg0: i32) -> (i32, i32) {
    %c0_i32 = arith.constant 0 : i32
    %c0_i32_0 = arith.constant 0 : i32
    %c0_i32_1 = arith.constant 0 : i32
    return %c0_i32, %c0_i32_0 : i32, i32
  }
  func.func @transform_6(%arg0: i32) -> (i32, i32) {
    %c0_i32 = arith.constant 0 : i32
    %c0_i32_0 = arith.constant 0 : i32
    %c0_i32_1 = arith.constant 0 : i32
    return %c0_i32, %c0_i32_0 : i32, i32
  }
  func.func @transform_7(%arg0: i32) -> (i32, i32) {
    %c0_i32 = arith.constant 0 : i32
    %c0_i32_0 = arith.constant 0 : i32
    %c0_i32_1 = arith.constant 0 : i32
    return %c0_i32, %c0_i32_0 : i32, i32
  }
  func.func @transform_8(%arg0: i32) -> (i32, i32, i32) {
    %c0_i32 = arith.constant 0 : i32
    %c0_i32_0 = arith.constant 0 : i32
    %c0_i32_1 = arith.constant 0 : i32
    return %arg0, %c0_i32, %c0_i32_0 : i32, i32, i32
  }
}

</mosaic_0001>

<llo_original>
// kernel: tpu_custom_call.1
$region0: #{tpu_custom_call.1}
  #allocation0 [shape = 'u32[]', space=smem, size = 0x4, offset = 0x4, fixed_abs, tag = 'smem constant byte address 0x4 - core index']
  #allocation1 [shape = 'u32[144,128]{1,0:T(1,128)}', space=vmem, size = 0x12000, scoped, tag = 'internal scratch']
  %s0 = inlined_call_operand.vmem [shape: bf16[8,9,16], index: 0, kind: input, shape index: {}]
  %s1 = inlined_call_operand.vmem [shape: bf16[2,16,256], index: 1, kind: input, shape index: {}]
  %s2 = inlined_call_operand.vmem [shape: bf16[128,128], index: 2, kind: input, shape index: {}]
  %s3 = inlined_call_operand.vmem [shape: f32[1,128], index: 3, kind: input, shape index: {}]
  %s4 = inlined_call_operand.vmem [shape: bf16[128,128], index: 4, kind: input, shape index: {}]
  %s5 = inlined_call_operand.vmem [shape: f32[1,128], index: 5, kind: input, shape index: {}]
  %s6 = inlined_call_operand.vmem [shape: bf16[128,8], index: 6, kind: input, shape index: {}]
  %s7 = inlined_call_operand.vmem [shape: f32[1,8], index: 7, kind: input, shape index: {}]
  %s8 = inlined_call_operand.hbm [shape: f32[8,8,8], index: 8, kind: output, shape index: {}]
  %s9 = sld [smem:[#allocation0]]
  $region65: #{tpu_custom_call.1} parent=0
    _
  %s11 = ssub.s32 1, %s9
  %s12 = scalar_select 0, %s11, %s9
  $region1: #{tpu_custom_call.1} parent=0
    #allocation2 [shape = 'u8[8192]{0}', space=vmem, size = 0x2000, scoped, tag = 'output window, operand 0']
    #allocation3 [shape = 's32[2]{0}', space=sflag, size = 0x8, scoped, tag = 'scoped memory for tpu_custom_call.1']
    %13 = vsyncpa [#allocation3], 0
    %s14 = scalar_lea.sflag [#allocation3], 1
    %15 = vsyncpa %s14, 0
    loop: start=0, step=1, limit=10
    $region2: #{tpu_custom_call.1} parent=1 // loop_pre_header
      _
    $region3: #{tpu_custom_call.1} parent=1 // loop_header
      %s17 = sphi 0, %s21
      %p18 = scmp.ge.s32.totalorder %s17, 10
      %s27 = sphi 0, %s29
      %s30 = sphi 0, %s27
      %s31 = sphi 0, %s30
      %s47 = sphi 0, %s31
      %s51 = sphi 0, %s51
      %s53 = sphi 0, %s51
      %s54 = sphi 0, %s53
      %s68 = sphi 0, %s54
      %s72 = sphi 0, %s72
      %s74 = sphi 0, %s72
      %s75 = sphi 0, %s74
      %s89 = sphi 0, %s75
      %s93 = sphi 0, %s93
      %s95 = sphi 0, %s93
      %s96 = sphi 0, %s95
      %s110 = sphi 0, %s96
      %s114 = sphi 0, %s114
      %s116 = sphi 0, %s114
      %s117 = sphi 0, %s116
      %s131 = sphi 0, %s117
      %s135 = sphi 0, %s135
      %s137 = sphi 0, %s135
      %s138 = sphi 0, %s137
      %s152 = sphi 0, %s138
      %s156 = sphi 0, %s156
      %s158 = sphi 0, %s156
      %s159 = sphi 0, %s158
      %s173 = sphi 0, %s159
      %s177 = sphi 0, %s177
      %s179 = sphi 0, %s177
      %s180 = sphi 0, %s179
      %s194 = sphi 0, %s180
      %s200 = sphi 0, %s202
      %s203 = sphi 0, %s200
      %s204 = sphi 0, %s203
      %s220 = sphi 0, %s204
    $region4: #{tpu_custom_call.1} parent=1 // loop_header_branch
      %20 = sbr.rel (%p18) target = $region8
    $region5: #{tpu_custom_call.1} parent=1 // loop_body
      %s22 = ssub.s32 %s17, 1
      %s23 = ssub.s32 %s17, 2
      %s24 = sadd.s32 %s17, 1
      %s25 = ssub.s32 %s17, %s24
      %p26 = scmp.eq.s32.totalorder %s25, 0
      %s28 = sadd.s32 %s27, 1
      %s29 = scalar_select %p26, %s27, %s28
      %p32 = pneg %p26
      %p33 = scmp.eq.s32.totalorder %s17, 7
      %p34 = por %p32, %p33
      %p35 = scmp.ne.s32.totalorder %s27, %s30
      %p36 = scmp.eq.s32.totalorder %s17, 0
      %p37 = por %p35, %p36
      %p38 = scmp.ne.s32.totalorder %s27, %s30
      %p39 = scmp.eq.s32.totalorder %s22, 7
      %p40 = por %p38, %p39
      %p41 = scmp.ne.s32.totalorder %s30, %s31
      %p42 = scmp.eq.s32.totalorder %s22, 0
      %p43 = por %p41, %p42
      %p44 = scmp.ne.s32.totalorder %s30, %s31
      %p45 = scmp.eq.s32.totalorder %s23, 7
      %p46 = por %p44, %p45
      %p48 = scmp.ne.s32.totalorder %s31, %s47
      %p49 = scmp.eq.s32.totalorder %s23, 0
      %p50 = por %p48, %p49
      %s52 = sadd.s32 %s51, 1
      %p55 = scmp.eq.s32.totalorder %s17, 7
      %p56 = scmp.ne.s32.totalorder %s51, %s53
      %p57 = scmp.eq.s32.totalorder %s17, 0
      %p58 = por %p56, %p57
      %p59 = scmp.ne.s32.totalorder %s51, %s53
      %p60 = scmp.eq.s32.totalorder %s22, 7
      %p61 = por %p59, %p60
      %p62 = scmp.ne.s32.totalorder %s53, %s54
      %p63 = scmp.eq.s32.totalorder %s22, 0
      %p64 = por %p62, %p63
      %p65 = scmp.ne.s32.totalorder %s53, %s54
      %p66 = scmp.eq.s32.totalorder %s23, 7
      %p67 = por %p65, %p66
      %p69 = scmp.ne.s32.totalorder %s54, %s68
      %p70 = scmp.eq.s32.totalorder %s23, 0
      %p71 = por %p69, %p70
      %s73 = sadd.s32 %s72, 1
      %p76 = scmp.eq.s32.totalorder %s17, 7
      %p77 = scmp.ne.s32.totalorder %s72, %s74
      %p78 = scmp.eq.s32.totalorder %s17, 0
      %p79 = por %p77, %p78
      %p80 = scmp.ne.s32.totalorder %s72, %s74
      %p81 = scmp.eq.s32.totalorder %s22, 7
      %p82 = por %p80, %p81
      %p83 = scmp.ne.s32.totalorder %s74, %s75
      %p84 = scmp.eq.s32.totalorder %s22, 0
      %p85 = por %p83, %p84
      %p86 = scmp.ne.s32.totalorder %s74, %s75
      %p87 = scmp.eq.s32.totalorder %s23, 7
      %p88 = por %p86, %p87
      %p90 = scmp.ne.s32.totalorder %s75, %s89
      %p91 = scmp.eq.s32.totalorder %s23, 0
      %p92 = por %p90, %p91
      %s94 = sadd.s32 %s93, 1
      %p97 = scmp.eq.s32.totalorder %s17, 7
      %p98 = scmp.ne.s32.totalorder %s93, %s95
      %p99 = scmp.eq.s32.totalorder %s17, 0
      %p100 = por %p98, %p99
      %p101 = scmp.ne.s32.totalorder %s93, %s95
      %p102 = scmp.eq.s32.totalorder %s22, 7
      %p103 = por %p101, %p102
      %p104 = scmp.ne.s32.totalorder %s95, %s96
      %p105 = scmp.eq.s32.totalorder %s22, 0
      %p106 = por %p104, %p105
      %p107 = scmp.ne.s32.totalorder %s95, %s96
      %p108 = scmp.eq.s32.totalorder %s23, 7
      %p109 = por %p107, %p108
      %p111 = scmp.ne.s32.totalorder %s96, %s110
      %p112 = scmp.eq.s32.totalorder %s23, 0
      %p113 = por %p111, %p112
      %s115 = sadd.s32 %s114, 1
      %p118 = scmp.eq.s32.totalorder %s17, 7
      %p119 = scmp.ne.s32.totalorder %s114, %s116
      %p120 = scmp.eq.s32.totalorder %s17, 0
      %p121 = por %p119, %p120
      %p122 = scmp.ne.s32.totalorder %s114, %s116
      %p123 = scmp.eq.s32.totalorder %s22, 7
      %p124 = por %p122, %p123
      %p125 = scmp.ne.s32.totalorder %s116, %s117
      %p126 = scmp.eq.s32.totalorder %s22, 0
      %p127 = por %p125, %p126
      %p128 = scmp.ne.s32.totalorder %s116, %s117
      %p129 = scmp.eq.s32.totalorder %s23, 7
      %p130 = por %p128, %p129
      %p132 = scmp.ne.s32.totalorder %s117, %s131
      %p133 = scmp.eq.s32.totalorder %s23, 0
      %p134 = por %p132, %p133
      %s136 = sadd.s32 %s135, 1
      %p139 = scmp.eq.s32.totalorder %s17, 7
      %p140 = scmp.ne.s32.totalorder %s135, %s137
      %p141 = scmp.eq.s32.totalorder %s17, 0
      %p142 = por %p140, %p141
      %p143 = scmp.ne.s32.totalorder %s135, %s137
      %p144 = scmp.eq.s32.totalorder %s22, 7
      %p145 = por %p143, %p144
      %p146 = scmp.ne.s32.totalorder %s137, %s138
      %p147 = scmp.eq.s32.totalorder %s22, 0
      %p148 = por %p146, %p147
      %p149 = scmp.ne.s32.totalorder %s137, %s138
      %p150 = scmp.eq.s32.totalorder %s23, 7
      %p151 = por %p149, %p150
      %p153 = scmp.ne.s32.totalorder %s138, %s152
      %p154 = scmp.eq.s32.totalorder %s23, 0
      %p155 = por %p153, %p154
      %s157 = sadd.s32 %s156, 1
      %p160 = scmp.eq.s32.totalorder %s17, 7
      %p161 = scmp.ne.s32.totalorder %s156, %s158
      %p162 = scmp.eq.s32.totalorder %s17, 0
      %p163 = por %p161, %p162
      %p164 = scmp.ne.s32.totalorder %s156, %s158
      %p165 = scmp.eq.s32.totalorder %s22, 7
      %p166 = por %p164, %p165
      %p167 = scmp.ne.s32.totalorder %s158, %s159
      %p168 = scmp.eq.s32.totalorder %s22, 0
      %p169 = por %p167, %p168
      %p170 = scmp.ne.s32.totalorder %s158, %s159
      %p171 = scmp.eq.s32.totalorder %s23, 7
      %p172 = por %p170, %p171
      %p174 = scmp.ne.s32.totalorder %s159, %s173
      %p175 = scmp.eq.s32.totalorder %s23, 0
      %p176 = por %p174, %p175
      %s178 = sadd.s32 %s177, 1
      %p181 = scmp.eq.s32.totalorder %s17, 7
      %p182 = scmp.ne.s32.totalorder %s177, %s179
      %p183 = scmp.eq.s32.totalorder %s17, 0
      %p184 = por %p182, %p183
      %p185 = scmp.ne.s32.totalorder %s177, %s179
      %p186 = scmp.eq.s32.totalorder %s22, 7
      %p187 = por %p185, %p186
      %p188 = scmp.ne.s32.totalorder %s179, %s180
      %p189 = scmp.eq.s32.totalorder %s22, 0
      %p190 = por %p188, %p189
      %p191 = scmp.ne.s32.totalorder %s179, %s180
      %p192 = scmp.eq.s32.totalorder %s23, 7
      %p193 = por %p191, %p192
      %p195 = scmp.ne.s32.totalorder %s180, %s194
      %p196 = scmp.eq.s32.totalorder %s23, 0
      %p197 = por %p195, %p196
      %s198 = ssub.s32 %s17, %s24
      %p199 = scmp.eq.s32.totalorder %s198, 0
      %s201 = sadd.s32 %s200, 1
      %s202 = scalar_select %p199, %s200, %s201
      %p205 = pneg %p199
      %p206 = scmp.eq.s32.totalorder %s17, 7
      %p207 = por %p205, %p206
      %p208 = scmp.ne.s32.totalorder %s200, %s203
      %p209 = scmp.eq.s32.totalorder %s17, 0
      %p210 = por %p208, %p209
      %p211 = scmp.ne.s32.totalorder %s200, %s203
      %p212 = scmp.eq.s32.totalorder %s22, 7
      %p213 = por %p211, %p212
      %p214 = scmp.ne.s32.totalorder %s203, %s204
      %p215 = scmp.eq.s32.totalorder %s22, 0
      %p216 = por %p214, %p215
      %p217 = scmp.ne.s32.totalorder %s203, %s204
      %p218 = scmp.eq.s32.totalorder %s23, 7
      %p219 = por %p217, %p218
      %p221 = scmp.ne.s32.totalorder %s204, %s220
      %p222 = scmp.eq.s32.totalorder %s23, 0
      %p223 = por %p221, %p222
      %p224 = scmp.le.s32.totalorder 1, %s17
      %p225 = scmp.lt.s32.totalorder %s17, 9
      %p226 = pnand %p224, %p225
      %p227 = pneg %p226
      // Predicated region
      $region9: #{tpu_custom_call.1} parent=5 // pred_check
        _
      $region10: #{tpu_custom_call.1} parent=5 // pred_check_branch
        %229 = sbr.rel (%p226) target = $region12
      $region11: #{tpu_custom_call.1} parent=5 // pred_region
        %s230 = ssub.s32 %s17, 1
        // Predicated region
        $region13: #{tpu_custom_call.1} parent=11 // pred_check
          %p231 = pneg %p64
        $region14: #{tpu_custom_call.1} parent=11 // pred_check_branch
          %233 = sbr.rel (%p231) target = $region16
        $region15: #{tpu_custom_call.1} parent=11 // pred_region
          _
        $region16: #{tpu_custom_call.1} parent=11 // pred_fallthru
          _
        // Predicated region
        $region17: #{tpu_custom_call.1} parent=11 // pred_check
          %p234 = pneg %p85
        $region18: #{tpu_custom_call.1} parent=11 // pred_check_branch
          %236 = sbr.rel (%p234) target = $region20
        $region19: #{tpu_custom_call.1} parent=11 // pred_region
          _
        $region20: #{tpu_custom_call.1} parent=11 // pred_fallthru
          _
        // Predicated region
        $region21: #{tpu_custom_call.1} parent=11 // pred_check
          %p237 = pneg %p106
        $region22: #{tpu_custom_call.1} parent=11 // pred_check_branch
          %239 = sbr.rel (%p237) target = $region24
        $region23: #{tpu_custom_call.1} parent=11 // pred_region
          _
        $region24: #{tpu_custom_call.1} parent=11 // pred_fallthru
          _
        // Predicated region
        $region25: #{tpu_custom_call.1} parent=11 // pred_check
          %p240 = pneg %p127
        $region26: #{tpu_custom_call.1} parent=11 // pred_check_branch
          %242 = sbr.rel (%p240) target = $region28
        $region27: #{tpu_custom_call.1} parent=11 // pred_region
          _
        $region28: #{tpu_custom_call.1} parent=11 // pred_fallthru
          _
        // Predicated region
        $region29: #{tpu_custom_call.1} parent=11 // pred_check
          %p243 = pneg %p148
        $region30: #{tpu_custom_call.1} parent=11 // pred_check_branch
          %245 = sbr.rel (%p243) target = $region32
        $region31: #{tpu_custom_call.1} parent=11 // pred_region
          _
        $region32: #{tpu_custom_call.1} parent=11 // pred_fallthru
          _
        // Predicated region
        $region33: #{tpu_custom_call.1} parent=11 // pred_check
          %p246 = pneg %p169
        $region34: #{tpu_custom_call.1} parent=11 // pred_check_branch
          %248 = sbr.rel (%p246) target = $region36
        $region35: #{tpu_custom_call.1} parent=11 // pred_region
          _
        $region36: #{tpu_custom_call.1} parent=11 // pred_fallthru
          _
        // Predicated region
        $region37: #{tpu_custom_call.1} parent=11 // pred_check
          %p249 = pneg %p190
        $region38: #{tpu_custom_call.1} parent=11 // pred_check_branch
          %251 = sbr.rel (%p249) target = $region40
        $region39: #{tpu_custom_call.1} parent=11 // pred_region
          _
        $region40: #{tpu_custom_call.1} parent=11 // pred_fallthru
          _
      $region12: #{tpu_custom_call.1} parent=5 // pred_fallthru
        _
      %p252 = scmp.lt.s32.totalorder %s17, 8
      // Predicated region
      $region41: #{tpu_custom_call.1} parent=5 // pred_check
        %p253 = pneg %p252
      $region42: #{tpu_custom_call.1} parent=5 // pred_check_branch
        %255 = sbr.rel (%p253) target = $region44
      $region43: #{tpu_custom_call.1} parent=5 // pred_region
        // Predicated region
        $region45: #{tpu_custom_call.1} parent=43 // pred_check
          %p256 = pneg %p37
        $region46: #{tpu_custom_call.1} parent=43 // pred_check_branch
          %258 = sbr.rel (%p256) target = $region48
        $region47: #{tpu_custom_call.1} parent=43 // pred_region
          %p259 = scmp.lt.s32.totalorder %s17, 7
          %s260 = scalar_select %p259, %s17, 7
          %s261 = smul.addr %s260, 2
          %s262 = smul.addr %s261, 4
          %s263 = scalar_lea.vmem %s0, %s262
        $region48: #{tpu_custom_call.1} parent=43 // pred_fallthru
          _
      $region44: #{tpu_custom_call.1} parent=5 // pred_fallthru
        _
      %p264 = scmp.le.s32.totalorder 1, %s17
      %p265 = scmp.lt.s32.totalorder %s17, 9
      %p266 = pnand %p264, %p265
      %p267 = pneg %p266
      // Predicated region
      $region49: #{tpu_custom_call.1} parent=5 // pred_check
        _
      $region50: #{tpu_custom_call.1} parent=5 // pred_check_branch
        %269 = sbr.rel (%p266) target = $region52
      $region51: #{tpu_custom_call.1} parent=5 // pred_region
        %s270 = ssub.s32 %s17, 1
        %p271 = scmp.lt.s32.totalorder %s22, 7
        %s272 = scalar_select %p271, %s22, 7
        %s273 = smul.addr %s272, 2
        %s274 = smul.addr %s273, 4
        %s275 = scalar_lea.vmem %s0, %s274
        %p276 = pneg %p43
        %p277 = pneg %p40
        %p278 = pneg %p64
        %p279 = pneg %p61
        %p280 = pneg %p85
        %p281 = pneg %p82
        %p282 = pneg %p106
        %p283 = pneg %p103
        %p284 = pneg %p127
        %p285 = pneg %p124
        %p286 = pneg %p148
        %p287 = pneg %p145
        %p288 = pneg %p169
        %p289 = pneg %p166
        %p290 = pneg %p190
        %p291 = pneg %p187
        %p292 = pneg %p216
        %p293 = pneg %p213
        %s294 = sand.u32 %s203, 1
        %s295 = scalar_lea.sflag [#allocation3], %s294
        %s296 = sand.u32 %s203, 1
        %s297 = smul.addr %s296, 8
        %s298 = scalar_lea.vmem [#allocation2], %s297
        %p299 = scmp.lt.s32.totalorder %s22, 7
        %s300 = scalar_select %p299, %s22, 7
        %s301 = smul.addr %s300, 2
        %s302 = smul.addr %s301, 4
        %s303 = scalar_lea.vmem %s0, %s302
        %v305 = vld [vmem:[%s303] sm:$0xf]
        %v306 = vld [vmem:[%s303 + $0x4] sm:$0x1]
        %v307 = vld [vmem:[%s1] sm:$0xff]
        %v308 = vld [vmem:[%s1 + $0x8] sm:$0xff]
        %s309 = scalar_lea.vmem %s1, 16
        %v310 = vld [vmem:[%s309] sm:$0xff]
        %v311 = vld [vmem:[%s309 + $0x8] sm:$0xff]
        %v314 = vunpack.c.l.b16 %v305
        %v315 = vunpack.c.l.b16 %v306
        %v316 = vpack.c.b16 %v315, %v314
        %v318 = vshrl.u32 %v316, 16
        %v320 = vshll.u32 %v316, 16
        %v322 = vrot.slane %v320, 1
        %v323 = vor.u32 %v318, %v322
        %v326 = vunpack.c.l.b16 %v310
        %v327 = vunpack.c.h.b16 %v310
        %v328 = vunpack.c.l.b16 %v311
        %v329 = vunpack.c.h.b16 %v311
        %v330 = vpack.c.b16 %v328, %v326
        %v331 = vpack.c.b16 %v329, %v327
        %vm334 = vcmask 130048
        %v336 = vsel %vm334, %v323, 0
        %338 = vmatprep.subr.bf16.mxu0 0
        %339 = vmatpush1.bf16.msra.mxu0 0
        %340 = vmatprep.subr.bf16.mxu0 0
        %341 = vmatpush1.bf16.msra.mxu0 0
        %342 = vmatprep.subr.bf16.mxu0 0
        %343 = vmatpush1.bf16.msra.mxu0 0
        %344 = vmatprep.subr.bf16.mxu0 0
        %345 = vmatpush1.bf16.msra.mxu0 0
        %346 = vmatprep.subr.bf16.mxu0 0
        %347 = vmatpush1.bf16.msra.mxu0 0
        %348 = vmatprep.subr.bf16.mxu0 0
        %349 = vmatpush1.bf16.msra.mxu0 0
        %350 = vmatprep.subr.bf16.mxu0 0
        %351 = vmatpush1.bf16.msra.mxu0 0
        %352 = vmatprep.subr.bf16.mxu0 %v331
        %353 = vmatpush1.bf16.msra.mxu0 %v330
        %354 = vmatprep.subr.bf16.mxu0 0
        %355 = vmatpush2.bf16.msra.mxu0 0
        %356 = vmatprep.subr.bf16.mxu0 0
        %357 = vmatpush2.bf16.msra.mxu0 0
        %358 = vmatprep.subr.bf16.mxu0 0
        %359 = vmatpush2.bf16.msra.mxu0 0
        %360 = vmatprep.subr.bf16.mxu0 0
        %361 = vmatpush2.bf16.msra.mxu0 0
        %362 = vmatprep.subr.bf16.mxu0 0
        %363 = vmatpush2.bf16.msra.mxu0 0
        %364 = vmatprep.subr.bf16.mxu0 0
        %365 = vmatpush2.bf16.msra.mxu0 0
        %366 = vmatprep.subr.bf16.mxu0 0
        %367 = vmatpush2.bf16.msra.mxu0 0
        %368 = vmatprep.subr.bf16.mxu0 0
        %369 = vmatpush2.bf16.msra.mxu0 0
        %370 = vmatprep.mubr.bf16.mxu0 0
        %371 = vmatmul.mubr.bf16.gmra.mxu0 %v336
        %v372 = vpop.f32.mrf.mxu0
        %v373 = vadd.f32 0.0, %v372
        %v374 = vpop.f32.mrf.mxu0
        %v375 = vadd.f32 0.0, %v374
        %v376 = vpop.f32.mrf.mxu0
        %v377 = vpop.f32.mrf.mxu0
        %378 = vdwg.mxu0
        %v381 = vunpack.c.l.b16 %v307
        %v382 = vunpack.c.h.b16 %v307
        %v383 = vunpack.c.l.b16 %v308
        %v384 = vunpack.c.h.b16 %v308
        %v385 = vpack.c.b16 %v383, %v381
        %v386 = vpack.c.b16 %v384, %v382
        %v390 = vsel %vm334, %v305, 0
        %392 = vmatprep.subr.bf16.mxu0 0
        %393 = vmatpush1.bf16.msra.mxu0 0
        %394 = vmatprep.subr.bf16.mxu0 0
        %395 = vmatpush1.bf16.msra.mxu0 0
        %396 = vmatprep.subr.bf16.mxu0 0
        %397 = vmatpush1.bf16.msra.mxu0 0
        %398 = vmatprep.subr.bf16.mxu0 0
        %399 = vmatpush1.bf16.msra.mxu0 0
        %400 = vmatprep.subr.bf16.mxu0 0
        %401 = vmatpush1.bf16.msra.mxu0 0
        %402 = vmatprep.subr.bf16.mxu0 0
        %403 = vmatpush1.bf16.msra.mxu0 0
        %404 = vmatprep.subr.bf16.mxu0 0
        %405 = vmatpush1.bf16.msra.mxu0 0
        %406 = vmatprep.subr.bf16.mxu0 %v386
        %407 = vmatpush1.bf16.msra.mxu0 %v385
        %408 = vmatprep.subr.bf16.mxu0 0
        %409 = vmatpush2.bf16.msra.mxu0 0
        %410 = vmatprep.subr.bf16.mxu0 0
        %411 = vmatpush2.bf16.msra.mxu0 0
        %412 = vmatprep.subr.bf16.mxu0 0
        %413 = vmatpush2.bf16.msra.mxu0 0
        %414 = vmatprep.subr.bf16.mxu0 0
        %415 = vmatpush2.bf16.msra.mxu0 0
        %416 = vmatprep.subr.bf16.mxu0 0
        %417 = vmatpush2.bf16.msra.mxu0 0
        %418 = vmatprep.subr.bf16.mxu0 0
        %419 = vmatpush2.bf16.msra.mxu0 0
        %420 = vmatprep.subr.bf16.mxu0 0
        %421 = vmatpush2.bf16.msra.mxu0 0
        %422 = vmatprep.subr.bf16.mxu0 0
        %423 = vmatpush2.bf16.msra.mxu0 0
        %424 = vmatprep.mubr.bf16.mxu0 0
        %425 = vmatmul.mubr.bf16.gmra.mxu0 %v390
        %v426 = vpop.f32.mrf.mxu0
        %v427 = vadd.f32 %v373, %v426
        %v428 = vpop.f32.mrf.mxu0
        %v429 = vadd.f32 %v375, %v428
        %v430 = vpop.f32.mrf.mxu0
        %v431 = vpop.f32.mrf.mxu0
        %432 = vdwg.mxu0
        %v433 = vmul.f32 %v427, %v427
        %v434 = vmul.f32 %v429, %v429
        %v435 = vadd.f32 %v433, %v434
        %v436 = vrsqrt.pop %v435
        %v437 = vmul.f32 %v435, %v436
        %vm438 = vcmp.eq.f32.partialorder %v435, inf
        %v439 = vsel %vm438, %v435, %v437
        %vm440 = vcmp.eq.f32.partialorder %v435, 0.0
        %v441 = vand.u32 %v435, 2147483648
        %v442 = vsel %vm440, %v441, %v439
        %v443 = vpack.c.bf16 %v442, %v442
        %v444 = vld [vmem:[%s2] sm:$0xf]
        %v445 = vld [vmem:[%s2 + $0x4] sm:$0xf]
        %v446 = vld [vmem:[%s2 + $0x8] sm:$0xf]
        %v447 = vld [vmem:[%s2 + $0xc] sm:$0xf]
        %v448 = vld [vmem:[%s2 + $0x10] sm:$0xf]
        %v449 = vld [vmem:[%s2 + $0x14] sm:$0xf]
        %v450 = vld [vmem:[%s2 + $0x18] sm:$0xf]
        %v451 = vld [vmem:[%s2 + $0x1c] sm:$0xf]
        %v452 = vld [vmem:[%s2 + $0x20] sm:$0xf]
        %v453 = vld [vmem:[%s2 + $0x24] sm:$0xf]
        %v454 = vld [vmem:[%s2 + $0x28] sm:$0xf]
        %v455 = vld [vmem:[%s2 + $0x2c] sm:$0xf]
        %v456 = vld [vmem:[%s2 + $0x30] sm:$0xf]
        %v457 = vld [vmem:[%s2 + $0x34] sm:$0xf]
        %v458 = vld [vmem:[%s2 + $0x38] sm:$0xf]
        %v459 = vld [vmem:[%s2 + $0x3c] sm:$0xf]
        %v460 = vld [vmem:[%s3] sm:$0x1]
        %v462 = vlaneseq
        %v463 = vshrl.u32 %v462, 7
        %v464 = vsub.s32 0, %v463
        %v465 = vrot.slane %v460, %v464
        %v483 = vunpack.c.l.b16 %v444
        %v484 = vunpack.c.l.b16 %v445
        %v485 = vunpack.c.l.b16 %v446
        %v486 = vunpack.c.l.b16 %v447
        %v487 = vunpack.c.l.b16 %v448
        %v488 = vunpack.c.l.b16 %v449
        %v489 = vunpack.c.l.b16 %v450
        %v490 = vunpack.c.l.b16 %v451
        %v491 = vunpack.c.l.b16 %v452
        %v492 = vunpack.c.l.b16 %v453
        %v493 = vunpack.c.l.b16 %v454
        %v494 = vunpack.c.l.b16 %v455
        %v495 = vunpack.c.l.b16 %v456
        %v496 = vunpack.c.l.b16 %v457
        %v497 = vunpack.c.l.b16 %v458
        %v498 = vunpack.c.l.b16 %v459
        %v499 = vpack.c.b16 %v484, %v483
        %v500 = vpack.c.b16 %v486, %v485
        %v501 = vpack.c.b16 %v488, %v487
        %v502 = vpack.c.b16 %v490, %v489
        %v503 = vpack.c.b16 %v492, %v491
        %v504 = vpack.c.b16 %v494, %v493
        %v505 = vpack.c.b16 %v496, %v495
        %v506 = vpack.c.b16 %v498, %v497
        %515 = vmatprep.subr.bf16.mxu0 0
        %516 = vmatpush1.bf16.msra.mxu0 %v506
        %517 = vmatprep.subr.bf16.mxu0 0
        %518 = vmatpush1.bf16.msra.mxu0 %v505
        %519 = vmatprep.subr.bf16.mxu0 0
        %520 = vmatpush1.bf16.msra.mxu0 %v504
        %521 = vmatprep.subr.bf16.mxu0 0
        %522 = vmatpush1.bf16.msra.mxu0 %v503
        %523 = vmatprep.subr.bf16.mxu0 0
        %524 = vmatpush1.bf16.msra.mxu0 %v502
        %525 = vmatprep.subr.bf16.mxu0 0
        %526 = vmatpush1.bf16.msra.mxu0 %v501
        %527 = vmatprep.subr.bf16.mxu0 0
        %528 = vmatpush1.bf16.msra.mxu0 %v500
        %529 = vmatprep.subr.bf16.mxu0 0
        %530 = vmatpush1.bf16.msra.mxu0 %v499
        %531 = vmatprep.subr.bf16.mxu0 0
        %532 = vmatpush2.bf16.msra.mxu0 0
        %533 = vmatprep.subr.bf16.mxu0 0
        %534 = vmatpush2.bf16.msra.mxu0 0
        %535 = vmatprep.subr.bf16.mxu0 0
        %536 = vmatpush2.bf16.msra.mxu0 0
        %537 = vmatprep.subr.bf16.mxu0 0
        %538 = vmatpush2.bf16.msra.mxu0 0
        %539 = vmatprep.subr.bf16.mxu0 0
        %540 = vmatpush2.bf16.msra.mxu0 0
        %541 = vmatprep.subr.bf16.mxu0 0
        %542 = vmatpush2.bf16.msra.mxu0 0
        %543 = vmatprep.subr.bf16.mxu0 0
        %544 = vmatpush2.bf16.msra.mxu0 0
        %545 = vmatprep.subr.bf16.mxu0 0
        %546 = vmatpush2.bf16.msra.mxu0 0
        %547 = vmatprep.mubr.bf16.mxu0 0
        %548 = vmatmul.mubr.bf16.gmra.mxu0 %v443
        %v549 = vpop.f32.mrf.mxu0
        %v550 = vadd.f32 %v465, %v549
        %v551 = vpop.f32.mrf.mxu0
        %v552 = vpop.f32.mrf.mxu0
        %v553 = vpop.f32.mrf.mxu0
        %554 = vdwg.mxu0
        %v555 = vmax.f32 %v550, 0.0
        %v556 = vpack.c.bf16 %v555, %v555
        %v557 = vld [vmem:[%s4] sm:$0xf]
        %v558 = vld [vmem:[%s4 + $0x4] sm:$0xf]
        %v559 = vld [vmem:[%s4 + $0x8] sm:$0xf]
        %v560 = vld [vmem:[%s4 + $0xc] sm:$0xf]
        %v561 = vld [vmem:[%s4 + $0x10] sm:$0xf]
        %v562 = vld [vmem:[%s4 + $0x14] sm:$0xf]
        %v563 = vld [vmem:[%s4 + $0x18] sm:$0xf]
        %v564 = vld [vmem:[%s4 + $0x1c] sm:$0xf]
        %v565 = vld [vmem:[%s4 + $0x20] sm:$0xf]
        %v566 = vld [vmem:[%s4 + $0x24] sm:$0xf]
        %v567 = vld [vmem:[%s4 + $0x28] sm:$0xf]
        %v568 = vld [vmem:[%s4 + $0x2c] sm:$0xf]
        %v569 = vld [vmem:[%s4 + $0x30] sm:$0xf]
        %v570 = vld [vmem:[%s4 + $0x34] sm:$0xf]
        %v571 = vld [vmem:[%s4 + $0x38] sm:$0xf]
        %v572 = vld [vmem:[%s4 + $0x3c] sm:$0xf]
        %v573 = vld [vmem:[%s5] sm:$0x1]
        %v575 = vlaneseq
        %v576 = vshrl.u32 %v575, 7
        %v577 = vsub.s32 0, %v576
        %v578 = vrot.slane %v573, %v577
        %v596 = vunpack.c.l.b16 %v557
        %v597 = vunpack.c.l.b16 %v558
        %v598 = vunpack.c.l.b16 %v559
        %v599 = vunpack.c.l.b16 %v560
        %v600 = vunpack.c.l.b16 %v561
        %v601 = vunpack.c.l.b16 %v562
        %v602 = vunpack.c.l.b16 %v563
        %v603 = vunpack.c.l.b16 %v564
        %v604 = vunpack.c.l.b16 %v565
        %v605 = vunpack.c.l.b16 %v566
        %v606 = vunpack.c.l.b16 %v567
        %v607 = vunpack.c.l.b16 %v568
        %v608 = vunpack.c.l.b16 %v569
        %v609 = vunpack.c.l.b16 %v570
        %v610 = vunpack.c.l.b16 %v571
        %v611 = vunpack.c.l.b16 %v572
        %v612 = vpack.c.b16 %v597, %v596
        %v613 = vpack.c.b16 %v599, %v598
        %v614 = vpack.c.b16 %v601, %v600
        %v615 = vpack.c.b16 %v603, %v602
        %v616 = vpack.c.b16 %v605, %v604
        %v617 = vpack.c.b16 %v607, %v606
        %v618 = vpack.c.b16 %v609, %v608
        %v619 = vpack.c.b16 %v611, %v610
        %628 = vmatprep.subr.bf16.mxu0 0
        %629 = vmatpush1.bf16.msra.mxu0 %v619
        %630 = vmatprep.subr.bf16.mxu0 0
        %631 = vmatpush1.bf16.msra.mxu0 %v618
        %632 = vmatprep.subr.bf16.mxu0 0
        %633 = vmatpush1.bf16.msra.mxu0 %v617
        %634 = vmatprep.subr.bf16.mxu0 0
        %635 = vmatpush1.bf16.msra.mxu0 %v616
        %636 = vmatprep.subr.bf16.mxu0 0
        %637 = vmatpush1.bf16.msra.mxu0 %v615
        %638 = vmatprep.subr.bf16.mxu0 0
        %639 = vmatpush1.bf16.msra.mxu0 %v614
        %640 = vmatprep.subr.bf16.mxu0 0
        %641 = vmatpush1.bf16.msra.mxu0 %v613
        %642 = vmatprep.subr.bf16.mxu0 0
        %643 = vmatpush1.bf16.msra.mxu0 %v612
        %644 = vmatprep.subr.bf16.mxu0 0
        %645 = vmatpush2.bf16.msra.mxu0 0
        %646 = vmatprep.subr.bf16.mxu0 0
        %647 = vmatpush2.bf16.msra.mxu0 0
        %648 = vmatprep.subr.bf16.mxu0 0
        %649 = vmatpush2.bf16.msra.mxu0 0
        %650 = vmatprep.subr.bf16.mxu0 0
        %651 = vmatpush2.bf16.msra.mxu0 0
        %652 = vmatprep.subr.bf16.mxu0 0
        %653 = vmatpush2.bf16.msra.mxu0 0
        %654 = vmatprep.subr.bf16.mxu0 0
        %655 = vmatpush2.bf16.msra.mxu0 0
        %656 = vmatprep.subr.bf16.mxu0 0
        %657 = vmatpush2.bf16.msra.mxu0 0
        %658 = vmatprep.subr.bf16.mxu0 0
        %659 = vmatpush2.bf16.msra.mxu0 0
        %660 = vmatprep.mubr.bf16.mxu0 0
        %661 = vmatmul.mubr.bf16.gmra.mxu0 %v556
        %v662 = vpop.f32.mrf.mxu0
        %v663 = vadd.f32 %v578, %v662
        %v664 = vpop.f32.mrf.mxu0
        %v665 = vpop.f32.mrf.mxu0
        %v666 = vpop.f32.mrf.mxu0
        %667 = vdwg.mxu0
        %v668 = vmax.f32 %v663, 0.0
        %v669 = vpack.c.bf16 %v668, %v668
        %v670 = vld [vmem:[%s6] sm:$0xf]
        %v671 = vld [vmem:[%s6 + $0x4] sm:$0xf]
        %v672 = vld [vmem:[%s6 + $0x8] sm:$0xf]
        %v673 = vld [vmem:[%s6 + $0xc] sm:$0xf]
        %v674 = vld [vmem:[%s6 + $0x10] sm:$0xf]
        %v675 = vld [vmem:[%s6 + $0x14] sm:$0xf]
        %v676 = vld [vmem:[%s6 + $0x18] sm:$0xf]
        %v677 = vld [vmem:[%s6 + $0x1c] sm:$0xf]
        %v678 = vld [vmem:[%s6 + $0x20] sm:$0xf]
        %v679 = vld [vmem:[%s6 + $0x24] sm:$0xf]
        %v680 = vld [vmem:[%s6 + $0x28] sm:$0xf]
        %v681 = vld [vmem:[%s6 + $0x2c] sm:$0xf]
        %v682 = vld [vmem:[%s6 + $0x30] sm:$0xf]
        %v683 = vld [vmem:[%s6 + $0x34] sm:$0xf]
        %v684 = vld [vmem:[%s6 + $0x38] sm:$0xf]
        %v685 = vld [vmem:[%s6 + $0x3c] sm:$0xf]
        %v686 = vld [vmem:[%s7] sm:$0x1]
        %v688 = vlaneseq
        %v689 = vshrl.u32 %v688, 7
        %v690 = vsub.s32 0, %v689
        %v691 = vrot.slane %v686, %v690
        %v709 = vunpack.c.l.b16 %v670
        %v710 = vunpack.c.l.b16 %v671
        %v711 = vunpack.c.l.b16 %v672
        %v712 = vunpack.c.l.b16 %v673
        %v713 = vunpack.c.l.b16 %v674
        %v714 = vunpack.c.l.b16 %v675
        %v715 = vunpack.c.l.b16 %v676
        %v716 = vunpack.c.l.b16 %v677
        %v717 = vunpack.c.l.b16 %v678
        %v718 = vunpack.c.l.b16 %v679
        %v719 = vunpack.c.l.b16 %v680
        %v720 = vunpack.c.l.b16 %v681
        %v721 = vunpack.c.l.b16 %v682
        %v722 = vunpack.c.l.b16 %v683
        %v723 = vunpack.c.l.b16 %v684
        %v724 = vunpack.c.l.b16 %v685
        %v725 = vpack.c.b16 %v710, %v709
        %v726 = vpack.c.b16 %v712, %v711
        %v727 = vpack.c.b16 %v714, %v713
        %v728 = vpack.c.b16 %v716, %v715
        %v729 = vpack.c.b16 %v718, %v717
        %v730 = vpack.c.b16 %v720, %v719
        %v731 = vpack.c.b16 %v722, %v721
        %v732 = vpack.c.b16 %v724, %v723
        %741 = vmatprep.subr.bf16.mxu0 0
        %742 = vmatpush1.bf16.msra.mxu0 %v732
        %743 = vmatprep.subr.bf16.mxu0 0
        %744 = vmatpush1.bf16.msra.mxu0 %v731
        %745 = vmatprep.subr.bf16.mxu0 0
        %746 = vmatpush1.bf16.msra.mxu0 %v730
        %747 = vmatprep.subr.bf16.mxu0 0
        %748 = vmatpush1.bf16.msra.mxu0 %v729
        %749 = vmatprep.subr.bf16.mxu0 0
        %750 = vmatpush1.bf16.msra.mxu0 %v728
        %751 = vmatprep.subr.bf16.mxu0 0
        %752 = vmatpush1.bf16.msra.mxu0 %v727
        %753 = vmatprep.subr.bf16.mxu0 0
        %754 = vmatpush1.bf16.msra.mxu0 %v726
        %755 = vmatprep.subr.bf16.mxu0 0
        %756 = vmatpush1.bf16.msra.mxu0 %v725
        %757 = vmatprep.subr.bf16.mxu0 0
        %758 = vmatpush2.bf16.msra.mxu0 0
        %759 = vmatprep.subr.bf16.mxu0 0
        %760 = vmatpush2.bf16.msra.mxu0 0
        %761 = vmatprep.subr.bf16.mxu0 0
        %762 = vmatpush2.bf16.msra.mxu0 0
        %763 = vmatprep.subr.bf16.mxu0 0
        %764 = vmatpush2.bf16.msra.mxu0 0
        %765 = vmatprep.subr.bf16.mxu0 0
        %766 = vmatpush2.bf16.msra.mxu0 0
        %767 = vmatprep.subr.bf16.mxu0 0
        %768 = vmatpush2.bf16.msra.mxu0 0
        %769 = vmatprep.subr.bf16.mxu0 0
        %770 = vmatpush2.bf16.msra.mxu0 0
        %771 = vmatprep.subr.bf16.mxu0 0
        %772 = vmatpush2.bf16.msra.mxu0 0
        %773 = vmatprep.mubr.bf16.mxu0 0
        %774 = vmatmul.mubr.bf16.gmra.mxu0 %v669
        %v775 = vpop.f32.mrf.mxu0
        %v776 = vadd.f32 %v691, %v775
        %v777 = vpop.f32.mrf.mxu0
        %v778 = vpop.f32.mrf.mxu0
        %v779 = vpop.f32.mrf.mxu0
        %780 = vdwg.mxu0
        %vm781 = vcmask 64512
        %782 = vst.msk [vmem:[%s298] sm:$0xff] %vm781, %v776
        %s783 = sand.u32 %s203, 1
        %s784 = scalar_lea.sflag [#allocation3], %s783
        %s785 = sand.u32 %s203, 1
        %s786 = smul.addr %s785, 8
        %s787 = scalar_lea.vmem [#allocation2], %s786
        // Predicated region
        $region53: #{tpu_custom_call.1} parent=51 // pred_check
          %p788 = pneg %p213
        $region54: #{tpu_custom_call.1} parent=51 // pred_check_branch
          %790 = sbr.rel (%p788) target = $region56
        $region55: #{tpu_custom_call.1} parent=51 // pred_region
          %s792 = ssub.s32 128, 128
          %793 = vsyncadd %s784, %s792
          %s794 = smul.addr %s22, 128
          %s795 = scalar_lea.hbm %s8, %s794
          %s797 = sshll.u32 %s787, 4
          %s798 = int_to_ptr.vmem [resolvable:$true] %s797
          %800 = dma.vmem_to_hbm [thread:$0]  %s798, 128, %s795, %s784
        $region56: #{tpu_custom_call.1} parent=51 // pred_fallthru
          _
      $region52: #{tpu_custom_call.1} parent=5 // pred_fallthru
        _
      %p801 = scmp.le.s32.totalorder 2, %s17
      // Predicated region
      $region57: #{tpu_custom_call.1} parent=5 // pred_check
        %p802 = pneg %p801
      $region58: #{tpu_custom_call.1} parent=5 // pred_check_branch
        %804 = sbr.rel (%p802) target = $region60
      $region59: #{tpu_custom_call.1} parent=5 // pred_region
        %s805 = ssub.s32 %s17, 2
        // Predicated region
        $region61: #{tpu_custom_call.1} parent=59 // pred_check
          %p806 = pneg %p219
        $region62: #{tpu_custom_call.1} parent=59 // pred_check_branch
          %808 = sbr.rel (%p806) target = $region64
        $region63: #{tpu_custom_call.1} parent=59 // pred_region
          %s809 = sand.u32 %s204, 1
          %s810 = scalar_lea.sflag [#allocation3], %s809
          %s811 = sand.u32 %s204, 1
          %s812 = smul.addr %s811, 8
          %s813 = scalar_lea.vmem [#allocation2], %s812
          %814 = dma.done %s810, 128
        $region64: #{tpu_custom_call.1} parent=59 // pred_fallthru
          _
      $region60: #{tpu_custom_call.1} parent=5 // pred_fallthru
        _
    $region6: #{tpu_custom_call.1} parent=1 // loop_footer
      %s21 = sadd.s32 1, %s17
    $region7: #{tpu_custom_call.1} parent=1 // loop_footer_branch
      %16 = sbr.rel target = $region3
    $region8: #{tpu_custom_call.1} parent=1 // loop_exit
      _
    %815 = vsyncpa [#allocation3], 1
    %s816 = scalar_lea.sflag [#allocation3], 1
    %817 = vsyncpa %s816, 1

// kernel: tpu_custom_call.1
$region0: #{tpu_custom_call.1}
  #allocation0 [shape = 'u32[]', space=smem, size = 0x4, offset = 0x4, fixed_abs, tag = 'smem constant byte address 0x4 - core index']
  #allocation1 [shape = 'u32[144,128]{1,0:T(1,128)}', space=vmem, size = 0x12000, scoped, tag = 'internal scratch']
  %s0 = inlined_call_operand.vmem [shape: bf16[8,9,16], index: 0, kind: input, shape index: {}]
  %s1 = inlined_call_operand.vmem [shape: bf16[2,16,256], index: 1, kind: input, shape index: {}]
  %s2 = inlined_call_operand.vmem [shape: bf16[128,128], index: 2, kind: input, shape index: {}]
  %s3 = inlined_call_operand.vmem [shape: f32[1,128], index: 3, kind: input, shape index: {}]
  %s4 = inlined_call_operand.vmem [shape: bf16[128,128], index: 4, kind: input, shape index: {}]
  %s5 = inlined_call_operand.vmem [shape: f32[1,128], index: 5, kind: input, shape index: {}]
  %s6 = inlined_call_operand.vmem [shape: bf16[128,8], index: 6, kind: input, shape index: {}]
  %s7 = inlined_call_operand.vmem [shape: f32[1,8], index: 7, kind: input, shape index: {}]
  %s8 = inlined_call_operand.hbm [shape: f32[8,8,8], index: 8, kind: output, shape index: {}]
  %s9 = sld [smem:[#allocation0]]
  $region65: #{tpu_custom_call.1} parent=0
    _
  %s11 = ssub.s32 1, %s9
  %s12 = scalar_select 0, %s11, %s9
  $region1: #{tpu_custom_call.1} parent=0
    #allocation2 [shape = 'u8[8192]{0}', space=vmem, size = 0x2000, scoped, tag = 'output window, operand 0']
    #allocation3 [shape = 's32[2]{0}', space=sflag, size = 0x8, scoped, tag = 'scoped memory for tpu_custom_call.1']
    %13 = vsyncpa [#allocation3], 0
    %s14 = scalar_lea.sflag [#allocation3], 1
    %15 = vsyncpa %s14, 0
    loop: start=0, step=1, limit=10
    $region2: #{tpu_custom_call.1} parent=1 // loop_pre_header
      _
    $region3: #{tpu_custom_call.1} parent=1 // loop_header
      %s17 = sphi 0, %s21
      %p18 = scmp.ge.s32.totalorder %s17, 10
      %s27 = sphi 0, %s29
      %s30 = sphi 0, %s27
      %s31 = sphi 0, %s30
      %s47 = sphi 0, %s31
      %s51 = sphi 0, %s51
      %s53 = sphi 0, %s51
      %s54 = sphi 0, %s53
      %s68 = sphi 0, %s54
      %s72 = sphi 0, %s72
      %s74 = sphi 0, %s72
      %s75 = sphi 0, %s74
      %s89 = sphi 0, %s75
      %s93 = sphi 0, %s93
      %s95 = sphi 0, %s93
      %s96 = sphi 0, %s95
      %s110 = sphi 0, %s96
      %s114 = sphi 0, %s114
      %s116 = sphi 0, %s114
      %s117 = sphi 0, %s116
      %s131 = sphi 0, %s117
      %s135 = sphi 0, %s135
      %s137 = sphi 0, %s135
      %s138 = sphi 0, %s137
      %s152 = sphi 0, %s138
      %s156 = sphi 0, %s156
      %s158 = sphi 0, %s156
      %s159 = sphi 0, %s158
      %s173 = sphi 0, %s159
      %s177 = sphi 0, %s177
      %s179 = sphi 0, %s177
      %s180 = sphi 0, %s179
      %s194 = sphi 0, %s180
      %s200 = sphi 0, %s202
      %s203 = sphi 0, %s200
      %s204 = sphi 0, %s203
      %s220 = sphi 0, %s204
    $region4: #{tpu_custom_call.1} parent=1 // loop_header_branch
      %20 = sbr.rel (%p18) target = $region8
    $region5: #{tpu_custom_call.1} parent=1 // loop_body
      %s22 = ssub.s32 %s17, 1
      %s23 = ssub.s32 %s17, 2
      %s24 = sadd.s32 %s17, 1
      %s25 = ssub.s32 %s17, %s24
      %p26 = scmp.eq.s32.totalorder %s25, 0
      %s28 = sadd.s32 %s27, 1
      %s29 = scalar_select %p26, %s27, %s28
      %p32 = pneg %p26
      %p33 = scmp.eq.s32.totalorder %s17, 7
      %p34 = por %p32, %p33
      %p35 = scmp.ne.s32.totalorder %s27, %s30
      %p36 = scmp.eq.s32.totalorder %s17, 0
      %p37 = por %p35, %p36
      %p38 = scmp.ne.s32.totalorder %s27, %s30
      %p39 = scmp.eq.s32.totalorder %s22, 7
      %p40 = por %p38, %p39
      %p41 = scmp.ne.s32.totalorder %s30, %s31
      %p42 = scmp.eq.s32.totalorder %s22, 0
      %p43 = por %p41, %p42
      %p44 = scmp.ne.s32.totalorder %s30, %s31
      %p45 = scmp.eq.s32.totalorder %s23, 7
      %p46 = por %p44, %p45
      %p48 = scmp.ne.s32.totalorder %s31, %s47
      %p49 = scmp.eq.s32.totalorder %s23, 0
      %p50 = por %p48, %p49
      %s52 = sadd.s32 %s51, 1
      %p55 = scmp.eq.s32.totalorder %s17, 7
      %p56 = scmp.ne.s32.totalorder %s51, %s53
      %p57 = scmp.eq.s32.totalorder %s17, 0
      %p58 = por %p56, %p57
      %p59 = scmp.ne.s32.totalorder %s51, %s53
      %p60 = scmp.eq.s32.totalorder %s22, 7
      %p61 = por %p59, %p60
      %p62 = scmp.ne.s32.totalorder %s53, %s54
      %p63 = scmp.eq.s32.totalorder %s22, 0
      %p64 = por %p62, %p63
      %p65 = scmp.ne.s32.totalorder %s53, %s54
      %p66 = scmp.eq.s32.totalorder %s23, 7
      %p67 = por %p65, %p66
      %p69 = scmp.ne.s32.totalorder %s54, %s68
      %p70 = scmp.eq.s32.totalorder %s23, 0
      %p71 = por %p69, %p70
      %s73 = sadd.s32 %s72, 1
      %p76 = scmp.eq.s32.totalorder %s17, 7
      %p77 = scmp.ne.s32.totalorder %s72, %s74
      %p78 = scmp.eq.s32.totalorder %s17, 0
      %p79 = por %p77, %p78
      %p80 = scmp.ne.s32.totalorder %s72, %s74
      %p81 = scmp.eq.s32.totalorder %s22, 7
      %p82 = por %p80, %p81
      %p83 = scmp.ne.s32.totalorder %s74, %s75
      %p84 = scmp.eq.s32.totalorder %s22, 0
      %p85 = por %p83, %p84
      %p86 = scmp.ne.s32.totalorder %s74, %s75
      %p87 = scmp.eq.s32.totalorder %s23, 7
      %p88 = por %p86, %p87
      %p90 = scmp.ne.s32.totalorder %s75, %s89
      %p91 = scmp.eq.s32.totalorder %s23, 0
      %p92 = por %p90, %p91
      %s94 = sadd.s32 %s93, 1
      %p97 = scmp.eq.s32.totalorder %s17, 7
      %p98 = scmp.ne.s32.totalorder %s93, %s95
      %p99 = scmp.eq.s32.totalorder %s17, 0
      %p100 = por %p98, %p99
      %p101 = scmp.ne.s32.totalorder %s93, %s95
      %p102 = scmp.eq.s32.totalorder %s22, 7
      %p103 = por %p101, %p102
      %p104 = scmp.ne.s32.totalorder %s95, %s96
      %p105 = scmp.eq.s32.totalorder %s22, 0
      %p106 = por %p104, %p105
      %p107 = scmp.ne.s32.totalorder %s95, %s96
      %p108 = scmp.eq.s32.totalorder %s23, 7
      %p109 = por %p107, %p108
      %p111 = scmp.ne.s32.totalorder %s96, %s110
      %p112 = scmp.eq.s32.totalorder %s23, 0
      %p113 = por %p111, %p112
      %s115 = sadd.s32 %s114, 1
      %p118 = scmp.eq.s32.totalorder %s17, 7
      %p119 = scmp.ne.s32.totalorder %s114, %s116
      %p120 = scmp.eq.s32.totalorder %s17, 0
      %p121 = por %p119, %p120
      %p122 = scmp.ne.s32.totalorder %s114, %s116
      %p123 = scmp.eq.s32.totalorder %s22, 7
      %p124 = por %p122, %p123
      %p125 = scmp.ne.s32.totalorder %s116, %s117
      %p126 = scmp.eq.s32.totalorder %s22, 0
      %p127 = por %p125, %p126
      %p128 = scmp.ne.s32.totalorder %s116, %s117
      %p129 = scmp.eq.s32.totalorder %s23, 7
      %p130 = por %p128, %p129
      %p132 = scmp.ne.s32.totalorder %s117, %s131
      %p133 = scmp.eq.s32.totalorder %s23, 0
      %p134 = por %p132, %p133
      %s136 = sadd.s32 %s135, 1
      %p139 = scmp.eq.s32.totalorder %s17, 7
      %p140 = scmp.ne.s32.totalorder %s135, %s137
      %p141 = scmp.eq.s32.totalorder %s17, 0
      %p142 = por %p140, %p141
      %p143 = scmp.ne.s32.totalorder %s135, %s137
      %p144 = scmp.eq.s32.totalorder %s22, 7
      %p145 = por %p143, %p144
      %p146 = scmp.ne.s32.totalorder %s137, %s138
      %p147 = scmp.eq.s32.totalorder %s22, 0
      %p148 = por %p146, %p147
      %p149 = scmp.ne.s32.totalorder %s137, %s138
      %p150 = scmp.eq.s32.totalorder %s23, 7
      %p151 = por %p149, %p150
      %p153 = scmp.ne.s32.totalorder %s138, %s152
      %p154 = scmp.eq.s32.totalorder %s23, 0
      %p155 = por %p153, %p154
      %s157 = sadd.s32 %s156, 1
      %p160 = scmp.eq.s32.totalorder %s17, 7
      %p161 = scmp.ne.s32.totalorder %s156, %s158
      %p162 = scmp.eq.s32.totalorder %s17, 0
      %p163 = por %p161, %p162
      %p164 = scmp.ne.s32.totalorder %s156, %s158
      %p165 = scmp.eq.s32.totalorder %s22, 7
      %p166 = por %p164, %p165
      %p167 = scmp.ne.s32.totalorder %s158, %s159
      %p168 = scmp.eq.s32.totalorder %s22, 0
      %p169 = por %p167, %p168
      %p170 = scmp.ne.s32.totalorder %s158, %s159
      %p171 = scmp.eq.s32.totalorder %s23, 7
      %p172 = por %p170, %p171
      %p174 = scmp.ne.s32.totalorder %s159, %s173
      %p175 = scmp.eq.s32.totalorder %s23, 0
      %p176 = por %p174, %p175
      %s178 = sadd.s32 %s177, 1
      %p181 = scmp.eq.s32.totalorder %s17, 7
      %p182 = scmp.ne.s32.totalorder %s177, %s179
      %p183 = scmp.eq.s32.totalorder %s17, 0
      %p184 = por %p182, %p183
      %p185 = scmp.ne.s32.totalorder %s177, %s179
      %p186 = scmp.eq.s32.totalorder %s22, 7
      %p187 = por %p185, %p186
      %p188 = scmp.ne.s32.totalorder %s179, %s180
      %p189 = scmp.eq.s32.totalorder %s22, 0
      %p190 = por %p188, %p189
      %p191 = scmp.ne.s32.totalorder %s179, %s180
      %p192 = scmp.eq.s32.totalorder %s23, 7
      %p193 = por %p191, %p192
      %p195 = scmp.ne.s32.totalorder %s180, %s194
      %p196 = scmp.eq.s32.totalorder %s23, 0
      %p197 = por %p195, %p196
      %s198 = ssub.s32 %s17, %s24
      %p199 = scmp.eq.s32.totalorder %s198, 0
      %s201 = sadd.s32 %s200, 1
      %s202 = scalar_select %p199, %s200, %s201
      %p205 = pneg %p199
      %p206 = scmp.eq.s32.totalorder %s17, 7
      %p207 = por %p205, %p206
      %p208 = scmp.ne.s32.totalorder %s200, %s203
      %p209 = scmp.eq.s32.totalorder %s17, 0
      %p210 = por %p208, %p209
      %p211 = scmp.ne.s32.totalorder %s200, %s203
      %p212 = scmp.eq.s32.totalorder %s22, 7
      %p213 = por %p211, %p212
      %p214 = scmp.ne.s32.totalorder %s203, %s204
      %p215 = scmp.eq.s32.totalorder %s22, 0
      %p216 = por %p214, %p215
      %p217 = scmp.ne.s32.totalorder %s203, %s204
      %p218 = scmp.eq.s32.totalorder %s23, 7
      %p219 = por %p217, %p218
      %p221 = scmp.ne.s32.totalorder %s204, %s220
      %p222 = scmp.eq.s32.totalorder %s23, 0
      %p223 = por %p221, %p222
      %p224 = scmp.le.s32.totalorder 1, %s17
      %p225 = scmp.lt.s32.totalorder %s17, 9
      %p226 = pnand %p224, %p225
      %p227 = pneg %p226
      // Predicated region
      $region9: #{tpu_custom_call.1} parent=5 // pred_check
        _
      $region10: #{tpu_custom_call.1} parent=5 // pred_check_branch
        %229 = sbr.rel (%p226) target = $region12
      $region11: #{tpu_custom_call.1} parent=5 // pred_region
        %s230 = ssub.s32 %s17, 1
        // Predicated region
        $region13: #{tpu_custom_call.1} parent=11 // pred_check
          %p231 = pneg %p64
        $region14: #{tpu_custom_call.1} parent=11 // pred_check_branch
          %233 = sbr.rel (%p231) target = $region16
        $region15: #{tpu_custom_call.1} parent=11 // pred_region
          _
        $region16: #{tpu_custom_call.1} parent=11 // pred_fallthru
          _
        // Predicated region
        $region17: #{tpu_custom_call.1} parent=11 // pred_check
          %p234 = pneg %p85
        $region18: #{tpu_custom_call.1} parent=11 // pred_check_branch
          %236 = sbr.rel (%p234) target = $region20
        $region19: #{tpu_custom_call.1} parent=11 // pred_region
          _
        $region20: #{tpu_custom_call.1} parent=11 // pred_fallthru
          _
        // Predicated region
        $region21: #{tpu_custom_call.1} parent=11 // pred_check
          %p237 = pneg %p106
        $region22: #{tpu_custom_call.1} parent=11 // pred_check_branch
          %239 = sbr.rel (%p237) target = $region24
        $region23: #{tpu_custom_call.1} parent=11 // pred_region
          _
        $region24: #{tpu_custom_call.1} parent=11 // pred_fallthru
          _
        // Predicated region
        $region25: #{tpu_custom_call.1} parent=11 // pred_check
          %p240 = pneg %p127
        $region26: #{tpu_custom_call.1} parent=11 // pred_check_branch
          %242 = sbr.rel (%p240) target = $region28
        $region27: #{tpu_custom_call.1} parent=11 // pred_region
          _
        $region28: #{tpu_custom_call.1} parent=11 // pred_fallthru
          _
        // Predicated region
        $region29: #{tpu_custom_call.1} parent=11 // pred_check
          %p243 = pneg %p148
        $region30: #{tpu_custom_call.1} parent=11 // pred_check_branch
          %245 = sbr.rel (%p243) target = $region32
        $region31: #{tpu_custom_call.1} parent=11 // pred_region
          _
        $region32: #{tpu_custom_call.1} parent=11 // pred_fallthru
          _
        // Predicated region
        $region33: #{tpu_custom_call.1} parent=11 // pred_check
          %p246 = pneg %p169
        $region34: #{tpu_custom_call.1} parent=11 // pred_check_branch
          %248 = sbr.rel (%p246) target = $region36
        $region35: #{tpu_custom_call.1} parent=11 // pred_region
          _
        $region36: #{tpu_custom_call.1} parent=11 // pred_fallthru
          _
        // Predicated region
        $region37: #{tpu_custom_call.1} parent=11 // pred_check
          %p249 = pneg %p190
        $region38: #{tpu_custom_call.1} parent=11 // pred_check_branch
          %251 = sbr.rel (%p249) target = $region40
        $region39: #{tpu_custom_call.1} parent=11 // pred_region
          _
        $region40: #{tpu_custom_call.1} parent=11 // pred_fallthru
          _
      $region12: #{tpu_custom_call.1} parent=5 // pred_fallthru
        _
      %p252 = scmp.lt.s32.totalorder %s17, 8
      // Predicated region
      $region41: #{tpu_custom_call.1} parent=5 // pred_check
        %p253 = pneg %p252
      $region42: #{tpu_custom_call.1} parent=5 // pred_check_branch
        %255 = sbr.rel (%p253) target = $region44
      $region43: #{tpu_custom_call.1} parent=5 // pred_region
        // Predicated region
        $region45: #{tpu_custom_call.1} parent=43 // pred_check
          %p256 = pneg %p37
        $region46: #{tpu_custom_call.1} parent=43 // pred_check_branch
          %258 = sbr.rel (%p256) target = $region48
        $region47: #{tpu_custom_call.1} parent=43 // pred_region
          %p259 = scmp.lt.s32.totalorder %s17, 7
          %s260 = scalar_select %p259, %s17, 7
          %s261 = smul.addr %s260, 2
          %s262 = smul.addr %s261, 4
          %s263 = scalar_lea.vmem %s0, %s262
        $region48: #{tpu_custom_call.1} parent=43 // pred_fallthru
          _
      $region44: #{tpu_custom_call.1} parent=5 // pred_fallthru
        _
      %p264 = scmp.le.s32.totalorder 1, %s17
      %p265 = scmp.lt.s32.totalorder %s17, 9
      %p266 = pnand %p264, %p265
      %p267 = pneg %p266
      // Predicated region
      $region49: #{tpu_custom_call.1} parent=5 // pred_check
        _
      $region50: #{tpu_custom_call.1} parent=5 // pred_check_branch
        %269 = sbr.rel (%p266) target = $region52
      $region51: #{tpu_custom_call.1} parent=5 // pred_region
        %s270 = ssub.s32 %s17, 1
        %p271 = scmp.lt.s32.totalorder %s22, 7
        %s272 = scalar_select %p271, %s22, 7
        %s273 = smul.addr %s272, 2
        %s274 = smul.addr %s273, 4
        %s275 = scalar_lea.vmem %s0, %s274
        %p276 = pneg %p43
        %p277 = pneg %p40
        %p278 = pneg %p64
        %p279 = pneg %p61
        %p280 = pneg %p85
        %p281 = pneg %p82
        %p282 = pneg %p106
        %p283 = pneg %p103
        %p284 = pneg %p127
        %p285 = pneg %p124
        %p286 = pneg %p148
        %p287 = pneg %p145
        %p288 = pneg %p169
        %p289 = pneg %p166
        %p290 = pneg %p190
        %p291 = pneg %p187
        %p292 = pneg %p216
        %p293 = pneg %p213
        %s294 = sand.u32 %s203, 1
        %s295 = scalar_lea.sflag [#allocation3], %s294
        %s296 = sand.u32 %s203, 1
        %s297 = smul.addr %s296, 8
        %s298 = scalar_lea.vmem [#allocation2], %s297
        %p299 = scmp.lt.s32.totalorder %s22, 7
        %s300 = scalar_select %p299, %s22, 7
        %s301 = smul.addr %s300, 2
        %s302 = smul.addr %s301, 4
        %s303 = scalar_lea.vmem %s0, %s302
        %v305 = vld [vmem:[%s303] sm:$0xf]
        %v306 = vld [vmem:[%s303 + $0x4] sm:$0x1]
        %v307 = vld [vmem:[%s1] sm:$0xff]
        %v308 = vld [vmem:[%s1 + $0x8] sm:$0xff]
        %s309 = scalar_lea.vmem %s1, 16
        %v310 = vld [vmem:[%s309] sm:$0xff]
        %v311 = vld [vmem:[%s309 + $0x8] sm:$0xff]
        %v314 = vunpack.c.l.b16 %v305
        %v315 = vunpack.c.l.b16 %v306
        %v316 = vpack.c.b16 %v315, %v314
        %v318 = vshrl.u32 %v316, 16
        %v320 = vshll.u32 %v316, 16
        %v322 = vrot.slane %v320, 1
        %v323 = vor.u32 %v318, %v322
        %v326 = vunpack.c.l.b16 %v310
        %v327 = vunpack.c.h.b16 %v310
        %v328 = vunpack.c.l.b16 %v311
        %v329 = vunpack.c.h.b16 %v311
        %v330 = vpack.c.b16 %v328, %v326
        %v331 = vpack.c.b16 %v329, %v327
        %vm334 = vcmask 130048
        %v336 = vsel %vm334, %v323, 0
        %338 = vmatprep.subr.bf16.mxu0 0
        %339 = vmatpush1.bf16.msra.mxu0 0
        %340 = vmatprep.subr.bf16.mxu0 0
        %341 = vmatpush1.bf16.msra.mxu0 0
        %342 = vmatprep.subr.bf16.mxu0 0
        %343 = vmatpush1.bf16.msra.mxu0 0
        %344 = vmatprep.subr.bf16.mxu0 0
        %345 = vmatpush1.bf16.msra.mxu0 0
        %346 = vmatprep.subr.bf16.mxu0 0
        %347 = vmatpush1.bf16.msra.mxu0 0
        %348 = vmatprep.subr.bf16.mxu0 0
        %349 = vmatpush1.bf16.msra.mxu0 0
        %350 = vmatprep.subr.bf16.mxu0 0
        %351 = vmatpush1.bf16.msra.mxu0 0
        %352 = vmatprep.subr.bf16.mxu0 %v331
        %353 = vmatpush1.bf16.msra.mxu0 %v330
        %354 = vmatprep.subr.bf16.mxu0 0
        %355 = vmatpush2.bf16.msra.mxu0 0
        %356 = vmatprep.subr.bf16.mxu0 0
        %357 = vmatpush2.bf16.msra.mxu0 0
        %358 = vmatprep.subr.bf16.mxu0 0
        %359 = vmatpush2.bf16.msra.mxu0 0
        %360 = vmatprep.subr.bf16.mxu0 0
        %361 = vmatpush2.bf16.msra.mxu0 0
        %362 = vmatprep.subr.bf16.mxu0 0
        %363 = vmatpush2.bf16.msra.mxu0 0
        %364 = vmatprep.subr.bf16.mxu0 0
        %365 = vmatpush2.bf16.msra.mxu0 0
        %366 = vmatprep.subr.bf16.mxu0 0
        %367 = vmatpush2.bf16.msra.mxu0 0
        %368 = vmatprep.subr.bf16.mxu0 0
        %369 = vmatpush2.bf16.msra.mxu0 0
        %370 = vmatprep.mubr.bf16.mxu0 0
        %371 = vmatmul.mubr.bf16.gmra.mxu0 %v336
        %v372 = vpop.f32.mrf.mxu0
        %v373 = vadd.f32 0.0, %v372
        %v374 = vpop.f32.mrf.mxu0
        %v375 = vadd.f32 0.0, %v374
        %v376 = vpop.f32.mrf.mxu0
        %v377 = vpop.f32.mrf.mxu0
        %378 = vdwg.mxu0
        %v381 = vunpack.c.l.b16 %v307
        %v382 = vunpack.c.h.b16 %v307
        %v383 = vunpack.c.l.b16 %v308
        %v384 = vunpack.c.h.b16 %v308
        %v385 = vpack.c.b16 %v383, %v381
        %v386 = vpack.c.b16 %v384, %v382
        %v390 = vsel %vm334, %v305, 0
        %392 = vmatprep.subr.bf16.mxu0 0
        %393 = vmatpush1.bf16.msra.mxu0 0
        %394 = vmatprep.subr.bf16.mxu0 0
        %395 = vmatpush1.bf16.msra.mxu0 0
        %396 = vmatprep.subr.bf16.mxu0 0
        %397 = vmatpush1.bf16.msra.mxu0 0
        %398 = vmatprep.subr.bf16.mxu0 0
        %399 = vmatpush1.bf16.msra.mxu0 0
        %400 = vmatprep.subr.bf16.mxu0 0
        %401 = vmatpush1.bf16.msra.mxu0 0
        %402 = vmatprep.subr.bf16.mxu0 0
        %403 = vmatpush1.bf16.msra.mxu0 0
        %404 = vmatprep.subr.bf16.mxu0 0
        %405 = vmatpush1.bf16.msra.mxu0 0
        %406 = vmatprep.subr.bf16.mxu0 %v386
        %407 = vmatpush1.bf16.msra.mxu0 %v385
        %408 = vmatprep.subr.bf16.mxu0 0
        %409 = vmatpush2.bf16.msra.mxu0 0
        %410 = vmatprep.subr.bf16.mxu0 0
        %411 = vmatpush2.bf16.msra.mxu0 0
        %412 = vmatprep.subr.bf16.mxu0 0
        %413 = vmatpush2.bf16.msra.mxu0 0
        %414 = vmatprep.subr.bf16.mxu0 0
        %415 = vmatpush2.bf16.msra.mxu0 0
        %416 = vmatprep.subr.bf16.mxu0 0
        %417 = vmatpush2.bf16.msra.mxu0 0
        %418 = vmatprep.subr.bf16.mxu0 0
        %419 = vmatpush2.bf16.msra.mxu0 0
        %420 = vmatprep.subr.bf16.mxu0 0
        %421 = vmatpush2.bf16.msra.mxu0 0
        %422 = vmatprep.subr.bf16.mxu0 0
        %423 = vmatpush2.bf16.msra.mxu0 0
        %424 = vmatprep.mubr.bf16.mxu0 0
        %425 = vmatmul.mubr.bf16.gmra.mxu0 %v390
        %v426 = vpop.f32.mrf.mxu0
        %v427 = vadd.f32 %v373, %v426
        %v428 = vpop.f32.mrf.mxu0
        %v429 = vadd.f32 %v375, %v428
        %v430 = vpop.f32.mrf.mxu0
        %v431 = vpop.f32.mrf.mxu0
        %432 = vdwg.mxu0
        %v433 = vmul.f32 %v427, %v427
        %v434 = vmul.f32 %v429, %v429
        %v435 = vadd.f32 %v433, %v434
        %v436 = vrsqrt.pop %v435
        %v437 = vmul.f32 %v435, %v436
        %vm438 = vcmp.eq.f32.partialorder %v435, inf
        %v439 = vsel %vm438, %v435, %v437
        %vm440 = vcmp.eq.f32.partialorder %v435, 0.0
        %v441 = vand.u32 %v435, 2147483648
        %v442 = vsel %vm440, %v441, %v439
        %v443 = vpack.c.bf16 %v442, %v442
        %v444 = vld [vmem:[%s2] sm:$0xf]
        %v445 = vld [vmem:[%s2 + $0x4] sm:$0xf]
        %v446 = vld [vmem:[%s2 + $0x8] sm:$0xf]
        %v447 = vld [vmem:[%s2 + $0xc] sm:$0xf]
        %v448 = vld [vmem:[%s2 + $0x10] sm:$0xf]
        %v449 = vld [vmem:[%s2 + $0x14] sm:$0xf]
        %v450 = vld [vmem:[%s2 + $0x18] sm:$0xf]
        %v451 = vld [vmem:[%s2 + $0x1c] sm:$0xf]
        %v452 = vld [vmem:[%s2 + $0x20] sm:$0xf]
        %v453 = vld [vmem:[%s2 + $0x24] sm:$0xf]
        %v454 = vld [vmem:[%s2 + $0x28] sm:$0xf]
        %v455 = vld [vmem:[%s2 + $0x2c] sm:$0xf]
        %v456 = vld [vmem:[%s2 + $0x30] sm:$0xf]
        %v457 = vld [vmem:[%s2 + $0x34] sm:$0xf]
        %v458 = vld [vmem:[%s2 + $0x38] sm:$0xf]
        %v459 = vld [vmem:[%s2 + $0x3c] sm:$0xf]
        %v460 = vld [vmem:[%s3] sm:$0x1]
        %v462 = vlaneseq
        %v463 = vshrl.u32 %v462, 7
        %v464 = vsub.s32 0, %v463
        %v465 = vrot.slane %v460, %v464
        %v483 = vunpack.c.l.b16 %v444
        %v484 = vunpack.c.l.b16 %v445
        %v485 = vunpack.c.l.b16 %v446
        %v486 = vunpack.c.l.b16 %v447
        %v487 = vunpack.c.l.b16 %v448
        %v488 = vunpack.c.l.b16 %v449
        %v489 = vunpack.c.l.b16 %v450
        %v490 = vunpack.c.l.b16 %v451
        %v491 = vunpack.c.l.b16 %v452
        %v492 = vunpack.c.l.b16 %v453
        %v493 = vunpack.c.l.b16 %v454
        %v494 = vunpack.c.l.b16 %v455
        %v495 = vunpack.c.l.b16 %v456
        %v496 = vunpack.c.l.b16 %v457
        %v497 = vunpack.c.l.b16 %v458
        %v498 = vunpack.c.l.b16 %v459
        %v499 = vpack.c.b16 %v484, %v483
        %v500 = vpack.c.b16 %v486, %v485
        %v501 = vpack.c.b16 %v488, %v487
        %v502 = vpack.c.b16 %v490, %v489
        %v503 = vpack.c.b16 %v492, %v491
        %v504 = vpack.c.b16 %v494, %v493
        %v505 = vpack.c.b16 %v496, %v495
        %v506 = vpack.c.b16 %v498, %v497
        %515 = vmatprep.subr.bf16.mxu0 0
        %516 = vmatpush1.bf16.msra.mxu0 %v506
        %517 = vmatprep.subr.bf16.mxu0 0
        %518 = vmatpush1.bf16.msra.mxu0 %v505
        %519 = vmatprep.subr.bf16.mxu0 0
        %520 = vmatpush1.bf16.msra.mxu0 %v504
        %521 = vmatprep.subr.bf16.mxu0 0
        %522 = vmatpush1.bf16.msra.mxu0 %v503
        %523 = vmatprep.subr.bf16.mxu0 0
        %524 = vmatpush1.bf16.msra.mxu0 %v502
        %525 = vmatprep.subr.bf16.mxu0 0
        %526 = vmatpush1.bf16.msra.mxu0 %v501
        %527 = vmatprep.subr.bf16.mxu0 0
        %528 = vmatpush1.bf16.msra.mxu0 %v500
        %529 = vmatprep.subr.bf16.mxu0 0
        %530 = vmatpush1.bf16.msra.mxu0 %v499
        %531 = vmatprep.subr.bf16.mxu0 0
        %532 = vmatpush2.bf16.msra.mxu0 0
        %533 = vmatprep.subr.bf16.mxu0 0
        %534 = vmatpush2.bf16.msra.mxu0 0
        %535 = vmatprep.subr.bf16.mxu0 0
        %536 = vmatpush2.bf16.msra.mxu0 0
        %537 = vmatprep.subr.bf16.mxu0 0
        %538 = vmatpush2.bf16.msra.mxu0 0
        %539 = vmatprep.subr.bf16.mxu0 0
        %540 = vmatpush2.bf16.msra.mxu0 0
        %541 = vmatprep.subr.bf16.mxu0 0
        %542 = vmatpush2.bf16.msra.mxu0 0
        %543 = vmatprep.subr.bf16.mxu0 0
        %544 = vmatpush2.bf16.msra.mxu0 0
        %545 = vmatprep.subr.bf16.mxu0 0
        %546 = vmatpush2.bf16.msra.mxu0 0
        %547 = vmatprep.mubr.bf16.mxu0 0
        %548 = vmatmul.mubr.bf16.gmra.mxu0 %v443
        %v549 = vpop.f32.mrf.mxu0
        %v550 = vadd.f32 %v465, %v549
        %v551 = vpop.f32.mrf.mxu0
        %v552 = vpop.f32.mrf.mxu0
        %v553 = vpop.f32.mrf.mxu0
        %554 = vdwg.mxu0
        %v555 = vmax.f32 %v550, 0.0
        %v556 = vpack.c.bf16 %v555, %v555
        %v557 = vld [vmem:[%s4] sm:$0xf]
        %v558 = vld [vmem:[%s4 + $0x4] sm:$0xf]
        %v559 = vld [vmem:[%s4 + $0x8] sm:$0xf]
        %v560 = vld [vmem:[%s4 + $0xc] sm:$0xf]
        %v561 = vld [vmem:[%s4 + $0x10] sm:$0xf]
        %v562 = vld [vmem:[%s4 + $0x14] sm:$0xf]
        %v563 = vld [vmem:[%s4 + $0x18] sm:$0xf]
        %v564 = vld [vmem:[%s4 + $0x1c] sm:$0xf]
        %v565 = vld [vmem:[%s4 + $0x20] sm:$0xf]
        %v566 = vld [vmem:[%s4 + $0x24] sm:$0xf]
        %v567 = vld [vmem:[%s4 + $0x28] sm:$0xf]
        %v568 = vld [vmem:[%s4 + $0x2c] sm:$0xf]
        %v569 = vld [vmem:[%s4 + $0x30] sm:$0xf]
        %v570 = vld [vmem:[%s4 + $0x34] sm:$0xf]
        %v571 = vld [vmem:[%s4 + $0x38] sm:$0xf]
        %v572 = vld [vmem:[%s4 + $0x3c] sm:$0xf]
        %v573 = vld [vmem:[%s5] sm:$0x1]
        %v575 = vlaneseq
        %v576 = vshrl.u32 %v575, 7
        %v577 = vsub.s32 0, %v576
        %v578 = vrot.slane %v573, %v577
        %v596 = vunpack.c.l.b16 %v557
        %v597 = vunpack.c.l.b16 %v558
        %v598 = vunpack.c.l.b16 %v559
        %v599 = vunpack.c.l.b16 %v560
        %v600 = vunpack.c.l.b16 %v561
        %v601 = vunpack.c.l.b16 %v562
        %v602 = vunpack.c.l.b16 %v563
        %v603 = vunpack.c.l.b16 %v564
        %v604 = vunpack.c.l.b16 %v565
        %v605 = vunpack.c.l.b16 %v566
        %v606 = vunpack.c.l.b16 %v567
        %v607 = vunpack.c.l.b16 %v568
        %v608 = vunpack.c.l.b16 %v569
        %v609 = vunpack.c.l.b16 %v570
        %v610 = vunpack.c.l.b16 %v571
        %v611 = vunpack.c.l.b16 %v572
        %v612 = vpack.c.b16 %v597, %v596
        %v613 = vpack.c.b16 %v599, %v598
        %v614 = vpack.c.b16 %v601, %v600
        %v615 = vpack.c.b16 %v603, %v602
        %v616 = vpack.c.b16 %v605, %v604
        %v617 = vpack.c.b16 %v607, %v606
        %v618 = vpack.c.b16 %v609, %v608
        %v619 = vpack.c.b16 %v611, %v610
        %628 = vmatprep.subr.bf16.mxu0 0
        %629 = vmatpush1.bf16.msra.mxu0 %v619
        %630 = vmatprep.subr.bf16.mxu0 0
        %631 = vmatpush1.bf16.msra.mxu0 %v618
        %632 = vmatprep.subr.bf16.mxu0 0
        %633 = vmatpush1.bf16.msra.mxu0 %v617
        %634 = vmatprep.subr.bf16.mxu0 0
        %635 = vmatpush1.bf16.msra.mxu0 %v616
        %636 = vmatprep.subr.bf16.mxu0 0
        %637 = vmatpush1.bf16.msra.mxu0 %v615
        %638 = vmatprep.subr.bf16.mxu0 0
        %639 = vmatpush1.bf16.msra.mxu0 %v614
        %640 = vmatprep.subr.bf16.mxu0 0
        %641 = vmatpush1.bf16.msra.mxu0 %v613
        %642 = vmatprep.subr.bf16.mxu0 0
        %643 = vmatpush1.bf16.msra.mxu0 %v612
        %644 = vmatprep.subr.bf16.mxu0 0
        %645 = vmatpush2.bf16.msra.mxu0 0
        %646 = vmatprep.subr.bf16.mxu0 0
        %647 = vmatpush2.bf16.msra.mxu0 0
        %648 = vmatprep.subr.bf16.mxu0 0
        %649 = vmatpush2.bf16.msra.mxu0 0
        %650 = vmatprep.subr.bf16.mxu0 0
        %651 = vmatpush2.bf16.msra.mxu0 0
        %652 = vmatprep.subr.bf16.mxu0 0
        %653 = vmatpush2.bf16.msra.mxu0 0
        %654 = vmatprep.subr.bf16.mxu0 0
        %655 = vmatpush2.bf16.msra.mxu0 0
        %656 = vmatprep.subr.bf16.mxu0 0
        %657 = vmatpush2.bf16.msra.mxu0 0
        %658 = vmatprep.subr.bf16.mxu0 0
        %659 = vmatpush2.bf16.msra.mxu0 0
        %660 = vmatprep.mubr.bf16.mxu0 0
        %661 = vmatmul.mubr.bf16.gmra.mxu0 %v556
        %v662 = vpop.f32.mrf.mxu0
        %v663 = vadd.f32 %v578, %v662
        %v664 = vpop.f32.mrf.mxu0
        %v665 = vpop.f32.mrf.mxu0
        %v666 = vpop.f32.mrf.mxu0
        %667 = vdwg.mxu0
        %v668 = vmax.f32 %v663, 0.0
        %v669 = vpack.c.bf16 %v668, %v668
        %v670 = vld [vmem:[%s6] sm:$0xf]
        %v671 = vld [vmem:[%s6 + $0x4] sm:$0xf]
        %v672 = vld [vmem:[%s6 + $0x8] sm:$0xf]
        %v673 = vld [vmem:[%s6 + $0xc] sm:$0xf]
        %v674 = vld [vmem:[%s6 + $0x10] sm:$0xf]
        %v675 = vld [vmem:[%s6 + $0x14] sm:$0xf]
        %v676 = vld [vmem:[%s6 + $0x18] sm:$0xf]
        %v677 = vld [vmem:[%s6 + $0x1c] sm:$0xf]
        %v678 = vld [vmem:[%s6 + $0x20] sm:$0xf]
        %v679 = vld [vmem:[%s6 + $0x24] sm:$0xf]
        %v680 = vld [vmem:[%s6 + $0x28] sm:$0xf]
        %v681 = vld [vmem:[%s6 + $0x2c] sm:$0xf]
        %v682 = vld [vmem:[%s6 + $0x30] sm:$0xf]
        %v683 = vld [vmem:[%s6 + $0x34] sm:$0xf]
        %v684 = vld [vmem:[%s6 + $0x38] sm:$0xf]
        %v685 = vld [vmem:[%s6 + $0x3c] sm:$0xf]
        %v686 = vld [vmem:[%s7] sm:$0x1]
        %v688 = vlaneseq
        %v689 = vshrl.u32 %v688, 7
        %v690 = vsub.s32 0, %v689
        %v691 = vrot.slane %v686, %v690
        %v709 = vunpack.c.l.b16 %v670
        %v710 = vunpack.c.l.b16 %v671
        %v711 = vunpack.c.l.b16 %v672
        %v712 = vunpack.c.l.b16 %v673
        %v713 = vunpack.c.l.b16 %v674
        %v714 = vunpack.c.l.b16 %v675
        %v715 = vunpack.c.l.b16 %v676
        %v716 = vunpack.c.l.b16 %v677
        %v717 = vunpack.c.l.b16 %v678
        %v718 = vunpack.c.l.b16 %v679
        %v719 = vunpack.c.l.b16 %v680
        %v720 = vunpack.c.l.b16 %v681
        %v721 = vunpack.c.l.b16 %v682
        %v722 = vunpack.c.l.b16 %v683
        %v723 = vunpack.c.l.b16 %v684
        %v724 = vunpack.c.l.b16 %v685
        %v725 = vpack.c.b16 %v710, %v709
        %v726 = vpack.c.b16 %v712, %v711
        %v727 = vpack.c.b16 %v714, %v713
        %v728 = vpack.c.b16 %v716, %v715
        %v729 = vpack.c.b16 %v718, %v717
        %v730 = vpack.c.b16 %v720, %v719
        %v731 = vpack.c.b16 %v722, %v721
        %v732 = vpack.c.b16 %v724, %v723
        %741 = vmatprep.subr.bf16.mxu0 0
        %742 = vmatpush1.bf16.msra.mxu0 %v732
        %743 = vmatprep.subr.bf16.mxu0 0
        %744 = vmatpush1.bf16.msra.mxu0 %v731
        %745 = vmatprep.subr.bf16.mxu0 0
        %746 = vmatpush1.bf16.msra.mxu0 %v730
        %747 = vmatprep.subr.bf16.mxu0 0
        %748 = vmatpush1.bf16.msra.mxu0 %v729
        %749 = vmatprep.subr.bf16.mxu0 0
        %750 = vmatpush1.bf16.msra.mxu0 %v728
        %751 = vmatprep.subr.bf16.mxu0 0
        %752 = vmatpush1.bf16.msra.mxu0 %v727
        %753 = vmatprep.subr.bf16.mxu0 0
        %754 = vmatpush1.bf16.msra.mxu0 %v726
        %755 = vmatprep.subr.bf16.mxu0 0
        %756 = vmatpush1.bf16.msra.mxu0 %v725
        %757 = vmatprep.subr.bf16.mxu0 0
        %758 = vmatpush2.bf16.msra.mxu0 0
        %759 = vmatprep.subr.bf16.mxu0 0
        %760 = vmatpush2.bf16.msra.mxu0 0
        %761 = vmatprep.subr.bf16.mxu0 0
        %762 = vmatpush2.bf16.msra.mxu0 0
        %763 = vmatprep.subr.bf16.mxu0 0
        %764 = vmatpush2.bf16.msra.mxu0 0
        %765 = vmatprep.subr.bf16.mxu0 0
        %766 = vmatpush2.bf16.msra.mxu0 0
        %767 = vmatprep.subr.bf16.mxu0 0
        %768 = vmatpush2.bf16.msra.mxu0 0
        %769 = vmatprep.subr.bf16.mxu0 0
        %770 = vmatpush2.bf16.msra.mxu0 0
        %771 = vmatprep.subr.bf16.mxu0 0
        %772 = vmatpush2.bf16.msra.mxu0 0
        %773 = vmatprep.mubr.bf16.mxu0 0
        %774 = vmatmul.mubr.bf16.gmra.mxu0 %v669
        %v775 = vpop.f32.mrf.mxu0
        %v776 = vadd.f32 %v691, %v775
        %v777 = vpop.f32.mrf.mxu0
        %v778 = vpop.f32.mrf.mxu0
        %v779 = vpop.f32.mrf.mxu0
        %780 = vdwg.mxu0
        %vm781 = vcmask 64512
        %782 = vst.msk [vmem:[%s298] sm:$0xff] %vm781, %v776
        %s783 = sand.u32 %s203, 1
        %s784 = scalar_lea.sflag [#allocation3], %s783
        %s785 = sand.u32 %s203, 1
        %s786 = smul.addr %s785, 8
        %s787 = scalar_lea.vmem [#allocation2], %s786
        // Predicated region
        $region53: #{tpu_custom_call.1} parent=51 // pred_check
          %p788 = pneg %p213
        $region54: #{tpu_custom_call.1} parent=51 // pred_check_branch
          %790 = sbr.rel (%p788) target = $region56
        $region55: #{tpu_custom_call.1} parent=51 // pred_region
          %s792 = ssub.s32 128, 128
          %793 = vsyncadd %s784, %s792
          %s794 = smul.addr %s22, 128
          %s795 = scalar_lea.hbm %s8, %s794
          %s797 = sshll.u32 %s787, 4
          %s798 = int_to_ptr.vmem [resolvable:$true] %s797
          %800 = dma.vmem_to_hbm [thread:$0]  %s798, 128, %s795, %s784
        $region56: #{tpu_custom_call.1} parent=51 // pred_fallthru
          _
      $region52: #{tpu_custom_call.1} parent=5 // pred_fallthru
        _
      %p801 = scmp.le.s32.totalorder 2, %s17
      // Predicated region
      $region57: #{tpu_custom_call.1} parent=5 // pred_check
        %p802 = pneg %p801
      $region58: #{tpu_custom_call.1} parent=5 // pred_check_branch
        %804 = sbr.rel (%p802) target = $region60
      $region59: #{tpu_custom_call.1} parent=5 // pred_region
        %s805 = ssub.s32 %s17, 2
        // Predicated region
        $region61: #{tpu_custom_call.1} parent=59 // pred_check
          %p806 = pneg %p219
        $region62: #{tpu_custom_call.1} parent=59 // pred_check_branch
          %808 = sbr.rel (%p806) target = $region64
        $region63: #{tpu_custom_call.1} parent=59 // pred_region
          %s809 = sand.u32 %s204, 1
          %s810 = scalar_lea.sflag [#allocation3], %s809
          %s811 = sand.u32 %s204, 1
          %s812 = smul.addr %s811, 8
          %s813 = scalar_lea.vmem [#allocation2], %s812
          %814 = dma.done %s810, 128
        $region64: #{tpu_custom_call.1} parent=59 // pred_fallthru
          _
      $region60: #{tpu_custom_call.1} parent=5 // pred_fallthru
        _
    $region6: #{tpu_custom_call.1} parent=1 // loop_footer
      %s21 = sadd.s32 1, %s17
    $region7: #{tpu_custom_call.1} parent=1 // loop_footer_branch
      %16 = sbr.rel target = $region3
    $region8: #{tpu_custom_call.1} parent=1 // loop_exit
      _
    %815 = vsyncpa [#allocation3], 1
    %s816 = scalar_lea.sflag [#allocation3], 1
    %817 = vsyncpa %s816, 1

</llo_original>
